<compile_context>
chip_gen: v7x
topology: tpu7x:2x2x1
jax: 0.10.0
libtpu: 0.0.40
codegen_flags: <defaults>
</compile_context>

<pallas_src>
import functools

import jax
import jax.numpy as jnp
from jax.experimental import pallas as pl
from jax.experimental.pallas import tpu as pltpu

OC_PAD = 128                      # lane-dense output-channel padding
VMEM_LIMIT = 32 * 1024 * 1024     # fits scoped VMEM on v5e / v6e / v7x


def _round_up(x, m):
    return ((x + m - 1) // m) * m


# ---------------------------------------------------------------------------
# Pallas kernels
# ---------------------------------------------------------------------------
def _conv_relu_pool_kernel(p_ref, w_ref, b_ref, o_ref):
    """Fused conv-as-matmul + bias + ReLU + MaxPool2d(2) for one image.

    p_ref : [1, 4, M, K_pad] bf16   im2col patches, grouped by 2x2-window parity
    w_ref : [K_pad, 128]     bf16   flattened conv weight (zero padded)
    b_ref : [1, 128]         f32    bias (zero padded)
    o_ref : [1, M, 128]      f32    pooled activation, M = (OH/2)*(OW/2)
    """
    w = w_ref[...]

    def corner(i):
        return jnp.dot(p_ref[0, i, :, :], w, preferred_element_type=jnp.float32)

    m = jnp.maximum(jnp.maximum(corner(0), corner(1)),
                    jnp.maximum(corner(2), corner(3)))
    # relu(x + b) is monotone in x, so bias/ReLU commute with the 2x2 window max.
    o_ref[0, :, :] = jnp.maximum(m + b_ref[...], 0.0).astype(o_ref.dtype)


def _classifier_kernel(x_ref, w3_ref, b3_ref, w1_ref, b1_ref, w2_ref, b2_ref, o_ref):
    """conv3 (degenerate 5x5 -> 1x1) + fc1(+ReLU) + fc2 fused; intermediates stay in VMEM."""
    h = jnp.dot(x_ref[...], w3_ref[...], preferred_element_type=jnp.float32)
    h = jnp.maximum(h + b3_ref[...], 0.0)
    h = jnp.dot(h.astype(w1_ref.dtype), w1_ref[...], preferred_element_type=jnp.float32)
    h = jnp.maximum(h + b1_ref[...], 0.0)
    h = jnp.dot(h.astype(w2_ref.dtype), w2_ref[...], preferred_element_type=jnp.float32)
    o_ref[...] = (h + b2_ref[...]).astype(o_ref.dtype)


# ---------------------------------------------------------------------------
# Glue (all fused under jit)
# ---------------------------------------------------------------------------
def _im2col_nhwc(x, k):
    """x: [N, H, W, C] -> [N, OH, OW, k*k*C], columns ordered (kh, kw, c) with c minor."""
    N, H, W, C = x.shape
    OH, OW = H - k + 1, W - k + 1
    cols = [x[:, i:i + OH, j:j + OW, :] for i in range(k) for j in range(k)]
    p = jnp.stack(cols, axis=3)                       # [N, OH, OW, k*k, C]
    return p.reshape(N, OH, OW, k * k * C), OH, OW


def _pool_grouped_patches(x, k, k_pad):
    """im2col + regroup rows by 2x2-pool parity + zero-pad K + cast bf16.

    Returns patches [N, 4, (OH/2)*(OW/2), k_pad] bf16 and (OH/2, OW/2).
    """
    p, OH, OW = _im2col_nhwc(x, k)
    N, K = p.shape[0], p.shape[-1]
    OHH, OWH = OH // 2, OW // 2
    # (n, ohh, oh_par, owh, ow_par, K) -> (n, oh_par, ow_par, ohh, owh, K)
    p = p.reshape(N, OHH, 2, OWH, 2, K).transpose(0, 2, 4, 1, 3, 5)
    p = p.reshape(N, 4, OHH * OWH, K)
    if k_pad > K:
        p = jnp.pad(p, ((0, 0), (0, 0), (0, 0), (0, k_pad - K)))
    return p.astype(jnp.bfloat16), OHH, OWH


def conv_relu_pool(x_nhwc, w_pad, b_pad):
    """Conv2d(k=5, stride=1, pad=0) + ReLU + MaxPool2d(2) -> [N, OH/2, OW/2, 128] f32."""
    N = x_nhwc.shape[0]
    k_pad = w_pad.shape[0]
    patches, OHH, OWH = _pool_grouped_patches(x_nhwc, 5, k_pad)
    M = OHH * OWH
    out = pl.pallas_call(
        _conv_relu_pool_kernel,
        out_shape=jax.ShapeDtypeStruct((N, M, OC_PAD), jnp.float32),
        grid=(N,),
        in_specs=[
            pl.BlockSpec((1, 4, M, k_pad), lambda n: (n, 0, 0, 0)),
            pl.BlockSpec((k_pad, OC_PAD), lambda n: (0, 0)),
            pl.BlockSpec((1, OC_PAD), lambda n: (0, 0)),
        ],
        out_specs=pl.BlockSpec((1, M, OC_PAD), lambda n: (n, 0, 0)),
        compiler_params=pltpu.CompilerParams(
            dimension_semantics=("parallel",),
            vmem_limit_bytes=VMEM_LIMIT),
    )(patches, w_pad, b_pad)
    return out.reshape(N, OHH, OWH, OC_PAD)


# ---------------------------------------------------------------------------
# Parameters (PyTorch layout) and one-time matmul-ready prep
# ---------------------------------------------------------------------------
def init_lenet_params(key, input_channels, out_classes):
    structure = [6, 16, 120, 84]
    ks = jax.random.split(key, 10)
    s = 0.1

    def w(k, shape):
        return jax.random.normal(k, shape, jnp.float32) * s

    return {
        "conv1_w": w(ks[0], (structure[0], input_channels, 5, 5)),
        "conv1_b": w(ks[1], (structure[0],)),
        "conv2_w": w(ks[2], (structure[1], structure[0], 5, 5)),
        "conv2_b": w(ks[3], (structure[1],)),
        "conv3_w": w(ks[4], (structure[2], structure[1], 5, 5)),
        "conv3_b": w(ks[5], (structure[2],)),
        "fc1_w": w(ks[6], (structure[3], structure[2])),   # torch Linear: [out, in]
        "fc1_b": w(ks[7], (structure[3],)),
        "fc2_w": w(ks[8], (out_classes, structure[3])),
        "fc2_b": w(ks[9], (out_classes,)),
    }


def prepare_lenet_params(params):
    """One-time prep: flatten to matmul layout, zero-pad K and OC to 128, cast to bf16."""
    def pad2(a, rows, cols):
        r, c = a.shape
        return jnp.pad(a, ((0, rows - r), (0, cols - c)))

    def conv_w(w):
        oc, cin, k, _ = w.shape
        # rows ordered (kh, kw, cin) with cin minor -> matches _im2col_nhwc column order
        m = jnp.transpose(w, (2, 3, 1, 0)).reshape(k * k * cin, oc)
        return pad2(m, _round_up(k * k * cin, 128), OC_PAD).astype(jnp.bfloat16)

    def fc_w(w):                                   # torch Linear weight [out, in]
        return pad2(w.T, OC_PAD, OC_PAD).astype(jnp.bfloat16)

    def bias(b):
        return jnp.pad(b, (0, OC_PAD - b.shape[0])).reshape(1, OC_PAD).astype(jnp.float32)

    return {
        "c1_w": conv_w(params["conv1_w"]), "c1_b": bias(params["conv1_b"]),
        "c2_w": conv_w(params["conv2_w"]), "c2_b": bias(params["conv2_b"]),
        "c3_w": conv_w(params["conv3_w"]), "c3_b": bias(params["conv3_b"]),
        "f1_w": fc_w(params["fc1_w"]),     "f1_b": bias(params["fc1_b"]),
        "f2_w": fc_w(params["fc2_w"]),     "f2_b": bias(params["fc2_b"]),
    }


# ---------------------------------------------------------------------------
# LeNet forward (structure = [6, 16, 120, 84]); whole graph under one jit
# ---------------------------------------------------------------------------
@functools.partial(jax.jit, static_argnames=("c1", "c2", "n_out"))
def lenet_forward(pp, x, *, c1, c2, n_out):
    # x: [N, Cin, H, W] (PyTorch NCHW). Internally everything is channel-last.
    x = jnp.transpose(x, (0, 2, 3, 1)).astype(jnp.float32)          # [N, 32, 32, Cin]
    h = conv_relu_pool(x, pp["c1_w"], pp["c1_b"])[..., :c1]          # [N, 14, 14, 6]
    h = conv_relu_pool(h, pp["c2_w"], pp["c2_b"])[..., :c2]          # [N, 5, 5, 16]

    # conv3 has a 5x5 input and 1x1 output -> a plain matmul on the flattened map,
    # fused with fc1 + fc2 in one kernel.
    N = h.shape[0]
    xf = h.reshape(N, -1)                                            # [N, 400] (kh, kw, c minor)
    k_pad = pp["c3_w"].shape[0]                                      # 512
    xf = jnp.pad(xf, ((0, 0), (0, k_pad - xf.shape[1]))).astype(jnp.bfloat16)

    out = pl.pallas_call(
        _classifier_kernel,
        out_shape=jax.ShapeDtypeStruct((N, OC_PAD), jnp.float32),
        in_specs=[
            pl.BlockSpec((N, k_pad), lambda: (0, 0)),
            pl.BlockSpec((k_pad, OC_PAD), lambda: (0, 0)),
            pl.BlockSpec((1, OC_PAD), lambda: (0, 0)),
            pl.BlockSpec((OC_PAD, OC_PAD), lambda: (0, 0)),
            pl.BlockSpec((1, OC_PAD), lambda: (0, 0)),
            pl.BlockSpec((OC_PAD, OC_PAD), lambda: (0, 0)),
            pl.BlockSpec((1, OC_PAD), lambda: (0, 0)),
        ],
        out_specs=pl.BlockSpec((N, OC_PAD), lambda: (0, 0)),
        compiler_params=pltpu.CompilerParams(vmem_limit_bytes=VMEM_LIMIT),
    )(xf, pp["c3_w"], pp["c3_b"], pp["f1_w"], pp["f1_b"], pp["f2_w"], pp["f2_b"])
    return out[:, :n_out]
    # TODO(synk): quantization / fixed-point (act_int, act_dec) branch of Convolution2D /
    # FullyConnected is not modeled (quantization=False path only).


if __name__ == "__main__":
    key = jax.random.PRNGKey(0)
    k_params, k_x = jax.random.split(key)

    input_channels = 1
    out_classes = 10
    batch = 2
    structure = [6, 16, 120, 84]
    # LeNet's flatten to structure[2]=120 requires 32x32 spatial input.
    x = jax.random.normal(k_x, (batch, input_channels, 32, 32), jnp.float32)

    params = init_lenet_params(k_params, input_channels, out_classes)
    prepped = prepare_lenet_params(params)    # one-time weight prep (padded, bf16)

    out = lenet_forward(prepped, x, c1=structure[0], c2=structure[1], n_out=out_classes)
    out = jax.block_until_ready(out)
    assert out.shape == (batch, out_classes), out.shape
    assert bool(jnp.all(jnp.isfinite(out))), "non-finite outputs"
    print("KERNEL_OK")
</pallas_src>

<mosaic_0001>
module attributes {stable_mosaic.version = 11 : i64} {
  func.func @_conv_relu_pool_kernel(%arg0: i32, %arg1: memref<1x4x196x128xbf16, #tpu.memory_space<vmem>>, %arg2: memref<128x128xbf16, #tpu.memory_space<vmem>>, %arg3: memref<1x128xf32, #tpu.memory_space<vmem>>, %arg4: memref<1x196x128xf32, #tpu.memory_space<vmem>>) attributes {dimension_semantics = [#tpu.dimension_semantics<parallel>], iteration_bounds = array<i64: 2>, scalar_prefetch = 0 : i64, scratch_operands = 0 : i64, tpu.core_type = #tpu.core_type<tc>, window_params = [{transform_indices = @transform_0, window_bounds = array<i64: 1, 4, 196, 128>}, {pipeline_mode = #tpu.pipeline_mode<synchronous>, transform_indices = @transform_1, window_bounds = array<i64: 128, 128>}, {pipeline_mode = #tpu.pipeline_mode<synchronous>, transform_indices = @transform_2, window_bounds = array<i64: 1, 128>}, {transform_indices = @transform_3, window_bounds = array<i64: 1, 196, 128>}]} {
    %c0 = arith.constant 0 : index
    %c0_0 = arith.constant 0 : index
    %0 = vector.load %arg2[%c0, %c0_0] : memref<128x128xbf16, #tpu.memory_space<vmem>>, vector<128x128xbf16>
    %c0_1 = arith.constant 0 : index
    %c0_2 = arith.constant 0 : index
    %c0_3 = arith.constant 0 : index
    %c0_4 = arith.constant 0 : index
    %1 = vector.load %arg1[%c0_1, %c0_2, %c0_3, %c0_4] : memref<1x4x196x128xbf16, #tpu.memory_space<vmem>>, vector<1x1x196x128xbf16>
    %2 = vector.shape_cast %1 : vector<1x1x196x128xbf16> to vector<196x128xbf16>
    %cst = arith.constant dense<0.000000e+00> : vector<196x128xf32>
    %3 = tpu.matmul %2, %0, %cst {dimension_numbers = #tpu.dot_dimension_numbers<[1], [0], [0], [1], [0, 0, 1, 1], [], []>} : vector<196x128xbf16>, vector<128x128xbf16>, vector<196x128xf32> -> vector<196x128xf32>
    %c0_5 = arith.constant 0 : index
    %c1 = arith.constant 1 : index
    %c0_6 = arith.constant 0 : index
    %c0_7 = arith.constant 0 : index
    %4 = vector.load %arg1[%c0_5, %c1, %c0_6, %c0_7] : memref<1x4x196x128xbf16, #tpu.memory_space<vmem>>, vector<1x1x196x128xbf16>
    %5 = vector.shape_cast %4 : vector<1x1x196x128xbf16> to vector<196x128xbf16>
    %cst_8 = arith.constant dense<0.000000e+00> : vector<196x128xf32>
    %6 = tpu.matmul %5, %0, %cst_8 {dimension_numbers = #tpu.dot_dimension_numbers<[1], [0], [0], [1], [0, 0, 1, 1], [], []>} : vector<196x128xbf16>, vector<128x128xbf16>, vector<196x128xf32> -> vector<196x128xf32>
    %7 = arith.maximumf %3, %6 : vector<196x128xf32>
    %c0_9 = arith.constant 0 : index
    %c2 = arith.constant 2 : index
    %c0_10 = arith.constant 0 : index
    %c0_11 = arith.constant 0 : index
    %8 = vector.load %arg1[%c0_9, %c2, %c0_10, %c0_11] : memref<1x4x196x128xbf16, #tpu.memory_space<vmem>>, vector<1x1x196x128xbf16>
    %9 = vector.shape_cast %8 : vector<1x1x196x128xbf16> to vector<196x128xbf16>
    %cst_12 = arith.constant dense<0.000000e+00> : vector<196x128xf32>
    %10 = tpu.matmul %9, %0, %cst_12 {dimension_numbers = #tpu.dot_dimension_numbers<[1], [0], [0], [1], [0, 0, 1, 1], [], []>} : vector<196x128xbf16>, vector<128x128xbf16>, vector<196x128xf32> -> vector<196x128xf32>
    %c0_13 = arith.constant 0 : index
    %c3 = arith.constant 3 : index
    %c0_14 = arith.constant 0 : index
    %c0_15 = arith.constant 0 : index
    %11 = vector.load %arg1[%c0_13, %c3, %c0_14, %c0_15] : memref<1x4x196x128xbf16, #tpu.memory_space<vmem>>, vector<1x1x196x128xbf16>
    %12 = vector.shape_cast %11 : vector<1x1x196x128xbf16> to vector<196x128xbf16>
    %cst_16 = arith.constant dense<0.000000e+00> : vector<196x128xf32>
    %13 = tpu.matmul %12, %0, %cst_16 {dimension_numbers = #tpu.dot_dimension_numbers<[1], [0], [0], [1], [0, 0, 1, 1], [], []>} : vector<196x128xbf16>, vector<128x128xbf16>, vector<196x128xf32> -> vector<196x128xf32>
    %14 = arith.maximumf %10, %13 : vector<196x128xf32>
    %15 = arith.maximumf %7, %14 : vector<196x128xf32>
    %c0_17 = arith.constant 0 : index
    %c0_18 = arith.constant 0 : index
    %16 = vector.load %arg3[%c0_17, %c0_18] : memref<1x128xf32, #tpu.memory_space<vmem>>, vector<1x128xf32>
    %17 = vector.broadcast %16 : vector<1x128xf32> to vector<196x128xf32>
    %18 = arith.addf %15, %17 : vector<196x128xf32>
    %cst_19 = arith.constant 0.000000e+00 : f32
    %19 = vector.broadcast %cst_19 : f32 to vector<196x128xf32>
    %20 = arith.maximumf %18, %19 : vector<196x128xf32>
    %c0_20 = arith.constant 0 : index
    %c0_21 = arith.constant 0 : index
    %c0_22 = arith.constant 0 : index
    %21 = vector.load %arg4[%c0_20, %c0_21, %c0_22] : memref<1x196x128xf32, #tpu.memory_space<vmem>>, vector<1x196x128xf32>
    %22 = vector.shape_cast %21 : vector<1x196x128xf32> to vector<196x128xf32>
    %23 = vector.shape_cast %20 : vector<196x128xf32> to vector<1x196x128xf32>
    tpu.vector_store %arg4[%c0_20, %c0_21, %c0_22], %23 {strides = array<i32>} : memref<1x196x128xf32, #tpu.memory_space<vmem>>, vector<1x196x128xf32>,
    return
  }
  func.func @transform_0(%arg0: i32) -> (i32, i32, i32, i32) {
    %c0_i32 = arith.constant 0 : i32
    %c0_i32_0 = arith.constant 0 : i32
    %c0_i32_1 = arith.constant 0 : i32
    %c0_i32_2 = arith.constant 0 : i32
    return %arg0, %c0_i32, %c0_i32_0, %c0_i32_1 : i32, i32, i32, i32
  }
  func.func @transform_1(%arg0: i32) -> (i32, i32) {
    %c0_i32 = arith.constant 0 : i32
    %c0_i32_0 = arith.constant 0 : i32
    %c0_i32_1 = arith.constant 0 : i32
    return %c0_i32, %c0_i32_0 : i32, i32
  }
  func.func @transform_2(%arg0: i32) -> (i32, i32) {
    %c0_i32 = arith.constant 0 : i32
    %c0_i32_0 = arith.constant 0 : i32
    %c0_i32_1 = arith.constant 0 : i32
    return %c0_i32, %c0_i32_0 : i32, i32
  }
  func.func @transform_3(%arg0: i32) -> (i32, i32, i32) {
    %c0_i32 = arith.constant 0 : i32
    %c0_i32_0 = arith.constant 0 : i32
    %c0_i32_1 = arith.constant 0 : i32
    return %arg0, %c0_i32, %c0_i32_0 : i32, i32, i32
  }
}

module attributes {stable_mosaic.version = 11 : i64} {
  func.func @_conv_relu_pool_kernel(%arg0: i32, %arg1: memref<1x4x25x256xbf16, #tpu.memory_space<vmem>>, %arg2: memref<256x128xbf16, #tpu.memory_space<vmem>>, %arg3: memref<1x128xf32, #tpu.memory_space<vmem>>, %arg4: memref<1x25x128xf32, #tpu.memory_space<vmem>>) attributes {dimension_semantics = [#tpu.dimension_semantics<parallel>], iteration_bounds = array<i64: 2>, scalar_prefetch = 0 : i64, scratch_operands = 0 : i64, tpu.core_type = #tpu.core_type<tc>, window_params = [{transform_indices = @transform_0, window_bounds = array<i64: 1, 4, 25, 256>}, {pipeline_mode = #tpu.pipeline_mode<synchronous>, transform_indices = @transform_1, window_bounds = array<i64: 256, 128>}, {pipeline_mode = #tpu.pipeline_mode<synchronous>, transform_indices = @transform_2, window_bounds = array<i64: 1, 128>}, {transform_indices = @transform_3, window_bounds = array<i64: 1, 25, 128>}]} {
    %c0 = arith.constant 0 : index
    %c0_0 = arith.constant 0 : index
    %0 = vector.load %arg2[%c0, %c0_0] : memref<256x128xbf16, #tpu.memory_space<vmem>>, vector<256x128xbf16>
    %c0_1 = arith.constant 0 : index
    %c0_2 = arith.constant 0 : index
    %c0_3 = arith.constant 0 : index
    %c0_4 = arith.constant 0 : index
    %1 = vector.load %arg1[%c0_1, %c0_2, %c0_3, %c0_4] : memref<1x4x25x256xbf16, #tpu.memory_space<vmem>>, vector<1x1x25x256xbf16>
    %2 = vector.shape_cast %1 : vector<1x1x25x256xbf16> to vector<25x256xbf16>
    %cst = arith.constant dense<0.000000e+00> : vector<25x128xf32>
    %3 = tpu.matmul %2, %0, %cst {dimension_numbers = #tpu.dot_dimension_numbers<[1], [0], [0], [1], [0, 0, 1, 1], [], []>} : vector<25x256xbf16>, vector<256x128xbf16>, vector<25x128xf32> -> vector<25x128xf32>
    %c0_5 = arith.constant 0 : index
    %c1 = arith.constant 1 : index
    %c0_6 = arith.constant 0 : index
    %c0_7 = arith.constant 0 : index
    %4 = vector.load %arg1[%c0_5, %c1, %c0_6, %c0_7] : memref<1x4x25x256xbf16, #tpu.memory_space<vmem>>, vector<1x1x25x256xbf16>
    %5 = vector.shape_cast %4 : vector<1x1x25x256xbf16> to vector<25x256xbf16>
    %cst_8 = arith.constant dense<0.000000e+00> : vector<25x128xf32>
    %6 = tpu.matmul %5, %0, %cst_8 {dimension_numbers = #tpu.dot_dimension_numbers<[1], [0], [0], [1], [0, 0, 1, 1], [], []>} : vector<25x256xbf16>, vector<256x128xbf16>, vector<25x128xf32> -> vector<25x128xf32>
    %7 = arith.maximumf %3, %6 : vector<25x128xf32>
    %c0_9 = arith.constant 0 : index
    %c2 = arith.constant 2 : index
    %c0_10 = arith.constant 0 : index
    %c0_11 = arith.constant 0 : index
    %8 = vector.load %arg1[%c0_9, %c2, %c0_10, %c0_11] : memref<1x4x25x256xbf16, #tpu.memory_space<vmem>>, vector<1x1x25x256xbf16>
    %9 = vector.shape_cast %8 : vector<1x1x25x256xbf16> to vector<25x256xbf16>
    %cst_12 = arith.constant dense<0.000000e+00> : vector<25x128xf32>
    %10 = tpu.matmul %9, %0, %cst_12 {dimension_numbers = #tpu.dot_dimension_numbers<[1], [0], [0], [1], [0, 0, 1, 1], [], []>} : vector<25x256xbf16>, vector<256x128xbf16>, vector<25x128xf32> -> vector<25x128xf32>
    %c0_13 = arith.constant 0 : index
    %c3 = arith.constant 3 : index
    %c0_14 = arith.constant 0 : index
    %c0_15 = arith.constant 0 : index
    %11 = vector.load %arg1[%c0_13, %c3, %c0_14, %c0_15] : memref<1x4x25x256xbf16, #tpu.memory_space<vmem>>, vector<1x1x25x256xbf16>
    %12 = vector.shape_cast %11 : vector<1x1x25x256xbf16> to vector<25x256xbf16>
    %cst_16 = arith.constant dense<0.000000e+00> : vector<25x128xf32>
    %13 = tpu.matmul %12, %0, %cst_16 {dimension_numbers = #tpu.dot_dimension_numbers<[1], [0], [0], [1], [0, 0, 1, 1], [], []>} : vector<25x256xbf16>, vector<256x128xbf16>, vector<25x128xf32> -> vector<25x128xf32>
    %14 = arith.maximumf %10, %13 : vector<25x128xf32>
    %15 = arith.maximumf %7, %14 : vector<25x128xf32>
    %c0_17 = arith.constant 0 : index
    %c0_18 = arith.constant 0 : index
    %16 = vector.load %arg3[%c0_17, %c0_18] : memref<1x128xf32, #tpu.memory_space<vmem>>, vector<1x128xf32>
    %17 = vector.broadcast %16 : vector<1x128xf32> to vector<25x128xf32>
    %18 = arith.addf %15, %17 : vector<25x128xf32>
    %cst_19 = arith.constant 0.000000e+00 : f32
    %19 = vector.broadcast %cst_19 : f32 to vector<25x128xf32>
    %20 = arith.maximumf %18, %19 : vector<25x128xf32>
    %c0_20 = arith.constant 0 : index
    %c0_21 = arith.constant 0 : index
    %c0_22 = arith.constant 0 : index
    %21 = vector.load %arg4[%c0_20, %c0_21, %c0_22] : memref<1x25x128xf32, #tpu.memory_space<vmem>>, vector<1x25x128xf32>
    %22 = vector.shape_cast %21 : vector<1x25x128xf32> to vector<25x128xf32>
    %23 = vector.shape_cast %20 : vector<25x128xf32> to vector<1x25x128xf32>
    tpu.vector_store %arg4[%c0_20, %c0_21, %c0_22], %23 {strides = array<i32>} : memref<1x25x128xf32, #tpu.memory_space<vmem>>, vector<1x25x128xf32>,
    return
  }
  func.func @transform_0(%arg0: i32) -> (i32, i32, i32, i32) {
    %c0_i32 = arith.constant 0 : i32
    %c0_i32_0 = arith.constant 0 : i32
    %c0_i32_1 = arith.constant 0 : i32
    %c0_i32_2 = arith.constant 0 : i32
    return %arg0, %c0_i32, %c0_i32_0, %c0_i32_1 : i32, i32, i32, i32
  }
  func.func @transform_1(%arg0: i32) -> (i32, i32) {
    %c0_i32 = arith.constant 0 : i32
    %c0_i32_0 = arith.constant 0 : i32
    %c0_i32_1 = arith.constant 0 : i32
    return %c0_i32, %c0_i32_0 : i32, i32
  }
  func.func @transform_2(%arg0: i32) -> (i32, i32) {
    %c0_i32 = arith.constant 0 : i32
    %c0_i32_0 = arith.constant 0 : i32
    %c0_i32_1 = arith.constant 0 : i32
    return %c0_i32, %c0_i32_0 : i32, i32
  }
  func.func @transform_3(%arg0: i32) -> (i32, i32, i32) {
    %c0_i32 = arith.constant 0 : i32
    %c0_i32_0 = arith.constant 0 : i32
    %c0_i32_1 = arith.constant 0 : i32
    return %arg0, %c0_i32, %c0_i32_0 : i32, i32, i32
  }
}

module attributes {stable_mosaic.version = 11 : i64} {
  func.func @_classifier_kernel(%arg0: memref<2x512xbf16, #tpu.memory_space<vmem>>, %arg1: memref<512x128xbf16, #tpu.memory_space<vmem>>, %arg2: memref<1x128xf32, #tpu.memory_space<vmem>>, %arg3: memref<128x128xbf16, #tpu.memory_space<vmem>>, %arg4: memref<1x128xf32, #tpu.memory_space<vmem>>, %arg5: memref<128x128xbf16, #tpu.memory_space<vmem>>, %arg6: memref<1x128xf32, #tpu.memory_space<vmem>>, %arg7: memref<2x128xf32, #tpu.memory_space<vmem>>) attributes {dimension_semantics = [], scalar_prefetch = 0 : i64, scratch_operands = 0 : i64, tpu.core_type = #tpu.core_type<tc>} {
    %c0 = arith.constant 0 : index
    %c0_0 = arith.constant 0 : index
    %0 = vector.load %arg0[%c0, %c0_0] : memref<2x512xbf16, #tpu.memory_space<vmem>>, vector<2x512xbf16>
    %c0_1 = arith.constant 0 : index
    %c0_2 = arith.constant 0 : index
    %1 = vector.load %arg1[%c0_1, %c0_2] : memref<512x128xbf16, #tpu.memory_space<vmem>>, vector<512x128xbf16>
    %cst = arith.constant dense<0.000000e+00> : vector<2x128xf32>
    %2 = tpu.matmul %0, %1, %cst {dimension_numbers = #tpu.dot_dimension_numbers<[1], [0], [0], [1], [0, 0, 1, 1], [], []>} : vector<2x512xbf16>, vector<512x128xbf16>, vector<2x128xf32> -> vector<2x128xf32>
    %c0_3 = arith.constant 0 : index
    %c0_4 = arith.constant 0 : index
    %3 = vector.load %arg2[%c0_3, %c0_4] : memref<1x128xf32, #tpu.memory_space<vmem>>, vector<1x128xf32>
    %4 = vector.broadcast %3 : vector<1x128xf32> to vector<2x128xf32>
    %5 = arith.addf %2, %4 : vector<2x128xf32>
    %cst_5 = arith.constant 0.000000e+00 : f32
    %6 = vector.broadcast %cst_5 : f32 to vector<2x128xf32>
    %7 = arith.maximumf %5, %6 : vector<2x128xf32>
    %8 = arith.truncf %7 : vector<2x128xf32> to vector<2x128xbf16>
    %c0_6 = arith.constant 0 : index
    %c0_7 = arith.constant 0 : index
    %9 = vector.load %arg3[%c0_6, %c0_7] : memref<128x128xbf16, #tpu.memory_space<vmem>>, vector<128x128xbf16>
    %cst_8 = arith.constant dense<0.000000e+00> : vector<2x128xf32>
    %10 = tpu.matmul %8, %9, %cst_8 {dimension_numbers = #tpu.dot_dimension_numbers<[1], [0], [0], [1], [0, 0, 1, 1], [], []>} : vector<2x128xbf16>, vector<128x128xbf16>, vector<2x128xf32> -> vector<2x128xf32>
    %c0_9 = arith.constant 0 : index
    %c0_10 = arith.constant 0 : index
    %11 = vector.load %arg4[%c0_9, %c0_10] : memref<1x128xf32, #tpu.memory_space<vmem>>, vector<1x128xf32>
    %12 = vector.broadcast %11 : vector<1x128xf32> to vector<2x128xf32>
    %13 = arith.addf %10, %12 : vector<2x128xf32>
    %cst_11 = arith.constant 0.000000e+00 : f32
    %14 = vector.broadcast %cst_11 : f32 to vector<2x128xf32>
    %15 = arith.maximumf %13, %14 : vector<2x128xf32>
    %16 = arith.truncf %15 : vector<2x128xf32> to vector<2x128xbf16>
    %c0_12 = arith.constant 0 : index
    %c0_13 = arith.constant 0 : index
    %17 = vector.load %arg5[%c0_12, %c0_13] : memref<128x128xbf16, #tpu.memory_space<vmem>>, vector<128x128xbf16>
    %cst_14 = arith.constant dense<0.000000e+00> : vector<2x128xf32>
    %18 = tpu.matmul %16, %17, %cst_14 {dimension_numbers = #tpu.dot_dimension_numbers<[1], [0], [0], [1], [0, 0, 1, 1], [], []>} : vector<2x128xbf16>, vector<128x128xbf16>, vector<2x128xf32> -> vector<2x128xf32>
    %c0_15 = arith.constant 0 : index
    %c0_16 = arith.constant 0 : index
    %19 = vector.load %arg6[%c0_15, %c0_16] : memref<1x128xf32, #tpu.memory_space<vmem>>, vector<1x128xf32>
    %20 = vector.broadcast %19 : vector<1x128xf32> to vector<2x128xf32>
    %21 = arith.addf %18, %20 : vector<2x128xf32>
    %c0_17 = arith.constant 0 : index
    %c0_18 = arith.constant 0 : index
    %22 = vector.load %arg7[%c0_17, %c0_18] : memref<2x128xf32, #tpu.memory_space<vmem>>, vector<2x128xf32>
    tpu.vector_store %arg7[%c0_17, %c0_18], %21 {strides = array<i32>} : memref<2x128xf32, #tpu.memory_space<vmem>>, vector<2x128xf32>,
    return
  }
}

</mosaic_0001>

<llo_original>
// kernel: lenet_forward.3
$region0: #{lenet_forward.3}
  #allocation0 [shape = 'u32[]', space=smem, size = 0x4, offset = 0x4, fixed_abs, tag = 'smem constant byte address 0x4 - core index']
  #allocation1 [shape = 'u32[144,128]{1,0:T(1,128)}', space=vmem, size = 0x12000, scoped, tag = 'internal scratch']
  %s0 = inlined_call_operand.vmem [shape: bf16[2,4,196,128], index: 0, kind: input, shape index: {}]
  %s1 = inlined_call_operand.vmem [shape: bf16[128,128], index: 1, kind: input, shape index: {}]
  %s2 = inlined_call_operand.vmem [shape: f32[1,128], index: 2, kind: input, shape index: {}]
  %s3 = inlined_call_operand.vmem [shape: f32[2,196,128], index: 3, kind: output, shape index: {}]
  %s4 = sld [smem:[#allocation0]]
  $region45: #{lenet_forward.3} parent=0
    _
  %s6 = ssub.s32 1, %s4
  %s7 = scalar_select 0, %s6, %s4
  loop: start=0, step=1, limit=4
  $region2: #{lenet_forward.3} parent=0 // loop_pre_header
    _
  $region3: #{lenet_forward.3} parent=0 // loop_header
    %s9 = sphi 0, %s13
    %p10 = scmp.ge.s32.totalorder %s9, 4
    %s19 = sphi 0, %s21
    %s22 = sphi 0, %s19
    %s23 = sphi 0, %s22
    %s39 = sphi 0, %s23
    %s43 = sphi 0, %s43
    %s45 = sphi 0, %s43
    %s46 = sphi 0, %s45
    %s60 = sphi 0, %s46
    %s64 = sphi 0, %s64
    %s66 = sphi 0, %s64
    %s67 = sphi 0, %s66
    %s81 = sphi 0, %s67
    %s87 = sphi 0, %s89
    %s90 = sphi 0, %s87
    %s91 = sphi 0, %s90
    %s107 = sphi 0, %s91
  $region4: #{lenet_forward.3} parent=0 // loop_header_branch
    %12 = sbr.rel (%p10) target = $region8
  $region5: #{lenet_forward.3} parent=0 // loop_body
    %s14 = ssub.s32 %s9, 1
    %s15 = ssub.s32 %s9, 2
    %s16 = sadd.s32 %s9, 1
    %s17 = ssub.s32 %s9, %s16
    %p18 = scmp.eq.s32.totalorder %s17, 0
    %s20 = sadd.s32 %s19, 1
    %s21 = scalar_select %p18, %s19, %s20
    %p24 = pneg %p18
    %p25 = scmp.eq.s32.totalorder %s9, 1
    %p26 = por %p24, %p25
    %p27 = scmp.ne.s32.totalorder %s19, %s22
    %p28 = scmp.eq.s32.totalorder %s9, 0
    %p29 = por %p27, %p28
    %p30 = scmp.ne.s32.totalorder %s19, %s22
    %p31 = scmp.eq.s32.totalorder %s14, 1
    %p32 = por %p30, %p31
    %p33 = scmp.ne.s32.totalorder %s22, %s23
    %p34 = scmp.eq.s32.totalorder %s14, 0
    %p35 = por %p33, %p34
    %p36 = scmp.ne.s32.totalorder %s22, %s23
    %p37 = scmp.eq.s32.totalorder %s15, 1
    %p38 = por %p36, %p37
    %p40 = scmp.ne.s32.totalorder %s23, %s39
    %p41 = scmp.eq.s32.totalorder %s15, 0
    %p42 = por %p40, %p41
    %s44 = sadd.s32 %s43, 1
    %p47 = scmp.eq.s32.totalorder %s9, 1
    %p48 = scmp.ne.s32.totalorder %s43, %s45
    %p49 = scmp.eq.s32.totalorder %s9, 0
    %p50 = por %p48, %p49
    %p51 = scmp.ne.s32.totalorder %s43, %s45
    %p52 = scmp.eq.s32.totalorder %s14, 1
    %p53 = por %p51, %p52
    %p54 = scmp.ne.s32.totalorder %s45, %s46
    %p55 = scmp.eq.s32.totalorder %s14, 0
    %p56 = por %p54, %p55
    %p57 = scmp.ne.s32.totalorder %s45, %s46
    %p58 = scmp.eq.s32.totalorder %s15, 1
    %p59 = por %p57, %p58
    %p61 = scmp.ne.s32.totalorder %s46, %s60
    %p62 = scmp.eq.s32.totalorder %s15, 0
    %p63 = por %p61, %p62
    %s65 = sadd.s32 %s64, 1
    %p68 = scmp.eq.s32.totalorder %s9, 1
    %p69 = scmp.ne.s32.totalorder %s64, %s66
    %p70 = scmp.eq.s32.totalorder %s9, 0
    %p71 = por %p69, %p70
    %p72 = scmp.ne.s32.totalorder %s64, %s66
    %p73 = scmp.eq.s32.totalorder %s14, 1
    %p74 = por %p72, %p73
    %p75 = scmp.ne.s32.totalorder %s66, %s67
    %p76 = scmp.eq.s32.totalorder %s14, 0
    %p77 = por %p75, %p76
    %p78 = scmp.ne.s32.totalorder %s66, %s67
    %p79 = scmp.eq.s32.totalorder %s15, 1
    %p80 = por %p78, %p79
    %p82 = scmp.ne.s32.totalorder %s67, %s81
    %p83 = scmp.eq.s32.totalorder %s15, 0
    %p84 = por %p82, %p83
    %s85 = ssub.s32 %s9, %s16
    %p86 = scmp.eq.s32.totalorder %s85, 0
    %s88 = sadd.s32 %s87, 1
    %s89 = scalar_select %p86, %s87, %s88
    %p92 = pneg %p86
    %p93 = scmp.eq.s32.totalorder %s9, 1
    %p94 = por %p92, %p93
    %p95 = scmp.ne.s32.totalorder %s87, %s90
    %p96 = scmp.eq.s32.totalorder %s9, 0
    %p97 = por %p95, %p96
    %p98 = scmp.ne.s32.totalorder %s87, %s90
    %p99 = scmp.eq.s32.totalorder %s14, 1
    %p100 = por %p98, %p99
    %p101 = scmp.ne.s32.totalorder %s90, %s91
    %p102 = scmp.eq.s32.totalorder %s14, 0
    %p103 = por %p101, %p102
    %p104 = scmp.ne.s32.totalorder %s90, %s91
    %p105 = scmp.eq.s32.totalorder %s15, 1
    %p106 = por %p104, %p105
    %p108 = scmp.ne.s32.totalorder %s91, %s107
    %p109 = scmp.eq.s32.totalorder %s15, 0
    %p110 = por %p108, %p109
    %p111 = scmp.le.s32.totalorder 1, %s9
    %p112 = scmp.lt.s32.totalorder %s9, 3
    %p113 = pnand %p111, %p112
    %p114 = pneg %p113
    // Predicated region
    $region9: #{lenet_forward.3} parent=5 // pred_check
      _
    $region10: #{lenet_forward.3} parent=5 // pred_check_branch
      %116 = sbr.rel (%p113) target = $region12
    $region11: #{lenet_forward.3} parent=5 // pred_region
      %s117 = ssub.s32 %s9, 1
      // Predicated region
      $region13: #{lenet_forward.3} parent=11 // pred_check
        %p118 = pneg %p56
      $region14: #{lenet_forward.3} parent=11 // pred_check_branch
        %120 = sbr.rel (%p118) target = $region16
      $region15: #{lenet_forward.3} parent=11 // pred_region
        _
      $region16: #{lenet_forward.3} parent=11 // pred_fallthru
        _
      // Predicated region
      $region17: #{lenet_forward.3} parent=11 // pred_check
        %p121 = pneg %p77
      $region18: #{lenet_forward.3} parent=11 // pred_check_branch
        %123 = sbr.rel (%p121) target = $region20
      $region19: #{lenet_forward.3} parent=11 // pred_region
        _
      $region20: #{lenet_forward.3} parent=11 // pred_fallthru
        _
    $region12: #{lenet_forward.3} parent=5 // pred_fallthru
      _
    %p124 = scmp.lt.s32.totalorder %s9, 2
    // Predicated region
    $region21: #{lenet_forward.3} parent=5 // pred_check
      %p125 = pneg %p124
    $region22: #{lenet_forward.3} parent=5 // pred_check_branch
      %127 = sbr.rel (%p125) target = $region24
    $region23: #{lenet_forward.3} parent=5 // pred_region
      // Predicated region
      $region25: #{lenet_forward.3} parent=23 // pred_check
        %p128 = pneg %p29
      $region26: #{lenet_forward.3} parent=23 // pred_check_branch
        %130 = sbr.rel (%p128) target = $region28
      $region27: #{lenet_forward.3} parent=23 // pred_region
        %p131 = scmp.lt.s32.totalorder %s9, 1
        %s132 = scalar_select %p131, %s9, 1
        %s133 = smul.addr %s132, 100
        %s134 = smul.addr %s133, 4
        %s135 = scalar_lea.vmem %s0, %s134
      $region28: #{lenet_forward.3} parent=23 // pred_fallthru
        _
    $region24: #{lenet_forward.3} parent=5 // pred_fallthru
      _
    %p136 = scmp.le.s32.totalorder 1, %s9
    %p137 = scmp.lt.s32.totalorder %s9, 3
    %p138 = pnand %p136, %p137
    %p139 = pneg %p138
    // Predicated region
    $region29: #{lenet_forward.3} parent=5 // pred_check
      _
    $region30: #{lenet_forward.3} parent=5 // pred_check_branch
      %141 = sbr.rel (%p138) target = $region32
    $region31: #{lenet_forward.3} parent=5 // pred_region
      %s142 = ssub.s32 %s9, 1
      %p143 = scmp.lt.s32.totalorder %s14, 1
      %s144 = scalar_select %p143, %s14, 1
      %s145 = smul.addr %s144, 100
      %s146 = smul.addr %s145, 4
      %s147 = scalar_lea.vmem %s0, %s146
      %p148 = pneg %p35
      %p149 = pneg %p32
      %p150 = pneg %p56
      %p151 = pneg %p53
      %p152 = pneg %p77
      %p153 = pneg %p74
      %p154 = pneg %p103
      %p155 = pneg %p100
      %p156 = scmp.lt.s32.totalorder %s14, 1
      %s157 = scalar_select %p156, %s14, 1
      %s158 = smul.addr %s157, 25
      %s159 = smul.addr %s158, 8
      %s160 = scalar_lea.vmem %s3, %s159
      %p161 = scmp.lt.s32.totalorder %s14, 1
      %s162 = scalar_select %p161, %s14, 1
      %s163 = smul.addr %s162, 100
      %s164 = smul.addr %s163, 4
      %s165 = scalar_lea.vmem %s0, %s164
      %p166 = scmp.lt.s32.totalorder %s14, 1
      %s167 = scalar_select %p166, %s14, 1
      %s168 = smul.addr %s167, 25
      %s169 = smul.addr %s168, 8
      %s170 = scalar_lea.vmem %s3, %s169
      %v172 = vld [vmem:[%s1] sm:$0xf]
      %v173 = vld [vmem:[%s1 + $0x4] sm:$0xf]
      %v174 = vld [vmem:[%s1 + $0x8] sm:$0xf]
      %v175 = vld [vmem:[%s1 + $0xc] sm:$0xf]
      %v176 = vld [vmem:[%s1 + $0x10] sm:$0xf]
      %v177 = vld [vmem:[%s1 + $0x14] sm:$0xf]
      %v178 = vld [vmem:[%s1 + $0x18] sm:$0xf]
      %v179 = vld [vmem:[%s1 + $0x1c] sm:$0xf]
      %v180 = vld [vmem:[%s1 + $0x20] sm:$0xf]
      %v181 = vld [vmem:[%s1 + $0x24] sm:$0xf]
      %v182 = vld [vmem:[%s1 + $0x28] sm:$0xf]
      %v183 = vld [vmem:[%s1 + $0x2c] sm:$0xf]
      %v184 = vld [vmem:[%s1 + $0x30] sm:$0xf]
      %v185 = vld [vmem:[%s1 + $0x34] sm:$0xf]
      %v186 = vld [vmem:[%s1 + $0x38] sm:$0xf]
      %v187 = vld [vmem:[%s1 + $0x3c] sm:$0xf]
      %v188 = vld [vmem:[%s165] sm:$0xf]
      %v189 = vld [vmem:[%s165 + $0x4] sm:$0xf]
      %v190 = vld [vmem:[%s165 + $0x8] sm:$0xf]
      %v191 = vld [vmem:[%s165 + $0xc] sm:$0xf]
      %v192 = vld [vmem:[%s165 + $0x10] sm:$0xf]
      %v193 = vld [vmem:[%s165 + $0x14] sm:$0xf]
      %v194 = vld [vmem:[%s165 + $0x18] sm:$0xf]
      %v195 = vld [vmem:[%s165 + $0x1c] sm:$0xf]
      %v196 = vld [vmem:[%s165 + $0x20] sm:$0xf]
      %v197 = vld [vmem:[%s165 + $0x24] sm:$0xf]
      %v198 = vld [vmem:[%s165 + $0x28] sm:$0xf]
      %v199 = vld [vmem:[%s165 + $0x2c] sm:$0xf]
      %v200 = vld [vmem:[%s165 + $0x30] sm:$0xf]
      %v201 = vld [vmem:[%s165 + $0x34] sm:$0xf]
      %v202 = vld [vmem:[%s165 + $0x38] sm:$0xf]
      %v203 = vld [vmem:[%s165 + $0x3c] sm:$0xf]
      %v204 = vld [vmem:[%s165 + $0x40] sm:$0xf]
      %v205 = vld [vmem:[%s165 + $0x44] sm:$0xf]
      %v206 = vld [vmem:[%s165 + $0x48] sm:$0xf]
      %v207 = vld [vmem:[%s165 + $0x4c] sm:$0xf]
      %v208 = vld [vmem:[%s165 + $0x50] sm:$0xf]
      %v209 = vld [vmem:[%s165 + $0x54] sm:$0xf]
      %v210 = vld [vmem:[%s165 + $0x58] sm:$0xf]
      %v211 = vld [vmem:[%s165 + $0x5c] sm:$0xf]
      %v212 = vld [vmem:[%s165 + $0x60] sm:$0x3]
      %v238 = vunpack.c.l.b16 %v188
      %v239 = vunpack.c.l.b16 %v189
      %v240 = vunpack.c.l.b16 %v190
      %v241 = vunpack.c.l.b16 %v191
      %v242 = vunpack.c.l.b16 %v192
      %v243 = vunpack.c.l.b16 %v193
      %v244 = vunpack.c.l.b16 %v194
      %v245 = vunpack.c.l.b16 %v195
      %v246 = vunpack.c.l.b16 %v196
      %v247 = vunpack.c.l.b16 %v197
      %v248 = vunpack.c.l.b16 %v198
      %v249 = vunpack.c.l.b16 %v199
      %v250 = vunpack.c.l.b16 %v200
      %v251 = vunpack.c.l.b16 %v201
      %v252 = vunpack.c.l.b16 %v202
      %v253 = vunpack.c.l.b16 %v203
      %v254 = vunpack.c.l.b16 %v204
      %v255 = vunpack.c.l.b16 %v205
      %v256 = vunpack.c.l.b16 %v206
      %v257 = vunpack.c.l.b16 %v207
      %v258 = vunpack.c.l.b16 %v208
      %v259 = vunpack.c.l.b16 %v209
      %v260 = vunpack.c.l.b16 %v210
      %v261 = vunpack.c.l.b16 %v211
      %v262 = vunpack.c.l.b16 %v212
      %v263 = vpack.c.b16 %v239, %v238
      %v264 = vpack.c.b16 %v241, %v240
      %v265 = vpack.c.b16 %v243, %v242
      %v266 = vpack.c.b16 %v245, %v244
      %v267 = vpack.c.b16 %v247, %v246
      %v268 = vpack.c.b16 %v249, %v248
      %v269 = vpack.c.b16 %v251, %v250
      %v270 = vpack.c.b16 %v253, %v252
      %v271 = vpack.c.b16 %v255, %v254
      %v272 = vpack.c.b16 %v257, %v256
      %v273 = vpack.c.b16 %v259, %v258
      %v274 = vpack.c.b16 %v261, %v260
      %v275 = vpack.c.b16 %v262, %v262
      %v305 = vunpack.c.l.b16 %v172
      %v306 = vunpack.c.l.b16 %v173
      %v307 = vunpack.c.l.b16 %v174
      %v308 = vunpack.c.l.b16 %v175
      %v309 = vunpack.c.l.b16 %v176
      %v310 = vunpack.c.l.b16 %v177
      %v311 = vunpack.c.l.b16 %v178
      %v312 = vunpack.c.l.b16 %v179
      %v313 = vunpack.c.l.b16 %v180
      %v314 = vunpack.c.l.b16 %v181
      %v315 = vunpack.c.l.b16 %v182
      %v316 = vunpack.c.l.b16 %v183
      %v317 = vunpack.c.l.b16 %v184
      %v318 = vunpack.c.l.b16 %v185
      %v319 = vunpack.c.l.b16 %v186
      %v320 = vunpack.c.l.b16 %v187
      %v321 = vpack.c.b16 %v306, %v305
      %v322 = vpack.c.b16 %v308, %v307
      %v323 = vpack.c.b16 %v310, %v309
      %v324 = vpack.c.b16 %v312, %v311
      %v325 = vpack.c.b16 %v314, %v313
      %v326 = vpack.c.b16 %v316, %v315
      %v327 = vpack.c.b16 %v318, %v317
      %v328 = vpack.c.b16 %v320, %v319
      %337 = vmatprep.subr.bf16.mxu0 0
      %338 = vmatpush1.bf16.msra.mxu0 %v321
      %339 = vmatprep.subr.bf16.mxu0 0
      %340 = vmatpush1.bf16.msra.mxu0 %v322
      %341 = vmatprep.subr.bf16.mxu0 0
      %342 = vmatpush1.bf16.msra.mxu0 %v323
      %343 = vmatprep.subr.bf16.mxu0 0
      %344 = vmatpush1.bf16.msra.mxu0 %v324
      %345 = vmatprep.subr.bf16.mxu0 0
      %346 = vmatpush1.bf16.msra.mxu0 %v325
      %347 = vmatprep.subr.bf16.mxu0 0
      %348 = vmatpush1.bf16.msra.mxu0 %v326
      %349 = vmatprep.subr.bf16.mxu0 0
      %350 = vmatpush1.bf16.msra.mxu0 %v327
      %351 = vmatprep.subr.bf16.mxu0 0
      %352 = vmatpush1.bf16.msra.mxu0 %v328
      %353 = vmatprep.subr.bf16.mxu0 0
      %354 = vmatpush1.bf16.msra.mxu0 0
      %355 = vmatprep.subr.bf16.mxu0 0
      %356 = vmatpush1.bf16.msra.mxu0 0
      %357 = vmatprep.subr.bf16.mxu0 0
      %358 = vmatpush1.bf16.msra.mxu0 0
      %359 = vmatprep.subr.bf16.mxu0 0
      %360 = vmatpush1.bf16.msra.mxu0 0
      %361 = vmatprep.subr.bf16.mxu0 0
      %362 = vmatpush1.bf16.msra.mxu0 0
      %363 = vmatprep.subr.bf16.mxu0 0
      %364 = vmatpush1.bf16.msra.mxu0 0
      %365 = vmatprep.subr.bf16.mxu0 0
      %366 = vmatpush1.bf16.msra.mxu0 0
      %367 = vmatprep.subr.bf16.mxu0 0
      %368 = vmatpush1.bf16.msra.mxu0 0
      %369 = vmatprep.mubr.bf16.mxu0 0
      %370 = vmatmul.mubr.bf16.gmra.mrb[0].mxu0 %v263
      %v371 = vpop.f32.mrb[0].mxu0
      %v372 = vadd.f32 0.0, %v371
      %v373 = vpop.f32.mrb[0].mxu0
      %v374 = vpop.f32.mrb[0].mxu0
      %v375 = vadd.f32 0.0, %v374
      %v376 = vpop.f32.mrb[0].mxu0
      %377 = vmatprep.mubr.bf16.mxu0 0
      %378 = vmatmul.mubr.bf16.gmra.mrb[0].mxu0 %v264
      %v379 = vpop.f32.mrb[0].mxu0
      %v380 = vadd.f32 0.0, %v379
      %v381 = vpop.f32.mrb[0].mxu0
      %v382 = vpop.f32.mrb[0].mxu0
      %v383 = vadd.f32 0.0, %v382
      %v384 = vpop.f32.mrb[0].mxu0
      %385 = vmatprep.mubr.bf16.mxu0 0
      %386 = vmatmul.mubr.bf16.gmra.mrb[0].mxu0 %v265
      %v387 = vpop.f32.mrb[0].mxu0
      %v388 = vadd.f32 0.0, %v387
      %v389 = vpop.f32.mrb[0].mxu0
      %v390 = vpop.f32.mrb[0].mxu0
      %v391 = vadd.f32 0.0, %v390
      %v392 = vpop.f32.mrb[0].mxu0
      %393 = vmatprep.mubr.bf16.mxu0 0
      %394 = vmatmul.mubr.bf16.gmra.mrb[0].mxu0 %v266
      %v395 = vpop.f32.mrb[0].mxu0
      %v396 = vadd.f32 0.0, %v395
      %v397 = vpop.f32.mrb[0].mxu0
      %v398 = vpop.f32.mrb[0].mxu0
      %v399 = vadd.f32 0.0, %v398
      %v400 = vpop.f32.mrb[0].mxu0
      %401 = vmatprep.mubr.bf16.mxu0 0
      %402 = vmatmul.mubr.bf16.gmra.mrb[0].mxu0 %v267
      %v403 = vpop.f32.mrb[0].mxu0
      %v404 = vadd.f32 0.0, %v403
      %v405 = vpop.f32.mrb[0].mxu0
      %v406 = vpop.f32.mrb[0].mxu0
      %v407 = vadd.f32 0.0, %v406
      %v408 = vpop.f32.mrb[0].mxu0
      %409 = vmatprep.mubr.bf16.mxu0 0
      %410 = vmatmul.mubr.bf16.gmra.mrb[0].mxu0 %v268
      %v411 = vpop.f32.mrb[0].mxu0
      %v412 = vadd.f32 0.0, %v411
      %v413 = vpop.f32.mrb[0].mxu0
      %v414 = vpop.f32.mrb[0].mxu0
      %v415 = vadd.f32 0.0, %v414
      %v416 = vpop.f32.mrb[0].mxu0
      %417 = vmatprep.mubr.bf16.mxu0 0
      %418 = vmatmul.mubr.bf16.gmra.mrb[0].mxu0 %v269
      %v419 = vpop.f32.mrb[0].mxu0
      %v420 = vadd.f32 0.0, %v419
      %v421 = vpop.f32.mrb[0].mxu0
      %v422 = vpop.f32.mrb[0].mxu0
      %v423 = vadd.f32 0.0, %v422
      %v424 = vpop.f32.mrb[0].mxu0
      %425 = vmatprep.mubr.bf16.mxu0 0
      %426 = vmatmul.mubr.bf16.gmra.mrb[0].mxu0 %v270
      %v427 = vpop.f32.mrb[0].mxu0
      %v428 = vadd.f32 0.0, %v427
      %v429 = vpop.f32.mrb[0].mxu0
      %v430 = vpop.f32.mrb[0].mxu0
      %v431 = vadd.f32 0.0, %v430
      %v432 = vpop.f32.mrb[0].mxu0
      %433 = vmatprep.mubr.bf16.mxu0 0
      %434 = vmatmul.mubr.bf16.gmra.mrb[0].mxu0 %v271
      %v435 = vpop.f32.mrb[0].mxu0
      %v436 = vadd.f32 0.0, %v435
      %v437 = vpop.f32.mrb[0].mxu0
      %v438 = vpop.f32.mrb[0].mxu0
      %v439 = vadd.f32 0.0, %v438
      %v440 = vpop.f32.mrb[0].mxu0
      %441 = vmatprep.mubr.bf16.mxu0 0
      %442 = vmatmul.mubr.bf16.gmra.mrb[0].mxu0 %v272
      %v443 = vpop.f32.mrb[0].mxu0
      %v444 = vadd.f32 0.0, %v443
      %v445 = vpop.f32.mrb[0].mxu0
      %v446 = vpop.f32.mrb[0].mxu0
      %v447 = vadd.f32 0.0, %v446
      %v448 = vpop.f32.mrb[0].mxu0
      %449 = vmatprep.mubr.bf16.mxu0 0
      %450 = vmatmul.mubr.bf16.gmra.mrb[0].mxu0 %v273
      %v451 = vpop.f32.mrb[0].mxu0
      %v452 = vadd.f32 0.0, %v451
      %v453 = vpop.f32.mrb[0].mxu0
      %v454 = vpop.f32.mrb[0].mxu0
      %v455 = vadd.f32 0.0, %v454
      %v456 = vpop.f32.mrb[0].mxu0
      %457 = vmatprep.mubr.bf16.mxu0 0
      %458 = vmatmul.mubr.bf16.gmra.mrb[0].mxu0 %v274
      %v459 = vpop.f32.mrb[0].mxu0
      %v460 = vadd.f32 0.0, %v459
      %v461 = vpop.f32.mrb[0].mxu0
      %v462 = vpop.f32.mrb[0].mxu0
      %v463 = vadd.f32 0.0, %v462
      %v464 = vpop.f32.mrb[0].mxu0
      %465 = vmatprep.mubr.bf16.mxu0 0
      %466 = vmatmul.mubr.bf16.gmra.mrb[0].mxu0 %v275
      %v467 = vpop.f32.mrb[0].mxu0
      %v468 = vadd.f32 0.0, %v467
      %v469 = vpop.f32.mrb[0].mxu0
      %v470 = vpop.f32.mrb[0].mxu0
      %v471 = vpop.f32.mrb[0].mxu0
      %472 = vdwg.mxu0
      %s473 = scalar_lea.vmem %s165, 100
      %v474 = vld [vmem:[%s473] sm:$0xf]
      %v475 = vld [vmem:[%s473 + $0x4] sm:$0xf]
      %v476 = vld [vmem:[%s473 + $0x8] sm:$0xf]
      %v477 = vld [vmem:[%s473 + $0xc] sm:$0xf]
      %v478 = vld [vmem:[%s473 + $0x10] sm:$0xf]
      %v479 = vld [vmem:[%s473 + $0x14] sm:$0xf]
      %v480 = vld [vmem:[%s473 + $0x18] sm:$0xf]
      %v481 = vld [vmem:[%s473 + $0x1c] sm:$0xf]
      %v482 = vld [vmem:[%s473 + $0x20] sm:$0xf]
      %v483 = vld [vmem:[%s473 + $0x24] sm:$0xf]
      %v484 = vld [vmem:[%s473 + $0x28] sm:$0xf]
      %v485 = vld [vmem:[%s473 + $0x2c] sm:$0xf]
      %v486 = vld [vmem:[%s473 + $0x30] sm:$0xf]
      %v487 = vld [vmem:[%s473 + $0x34] sm:$0xf]
      %v488 = vld [vmem:[%s473 + $0x38] sm:$0xf]
      %v489 = vld [vmem:[%s473 + $0x3c] sm:$0xf]
      %v490 = vld [vmem:[%s473 + $0x40] sm:$0xf]
      %v491 = vld [vmem:[%s473 + $0x44] sm:$0xf]
      %v492 = vld [vmem:[%s473 + $0x48] sm:$0xf]
      %v493 = vld [vmem:[%s473 + $0x4c] sm:$0xf]
      %v494 = vld [vmem:[%s473 + $0x50] sm:$0xf]
      %v495 = vld [vmem:[%s473 + $0x54] sm:$0xf]
      %v496 = vld [vmem:[%s473 + $0x58] sm:$0xf]
      %v497 = vld [vmem:[%s473 + $0x5c] sm:$0xf]
      %v498 = vld [vmem:[%s473 + $0x60] sm:$0x3]
      %v524 = vunpack.c.l.b16 %v474
      %v525 = vunpack.c.l.b16 %v475
      %v526 = vunpack.c.l.b16 %v476
      %v527 = vunpack.c.l.b16 %v477
      %v528 = vunpack.c.l.b16 %v478
      %v529 = vunpack.c.l.b16 %v479
      %v530 = vunpack.c.l.b16 %v480
      %v531 = vunpack.c.l.b16 %v481
      %v532 = vunpack.c.l.b16 %v482
      %v533 = vunpack.c.l.b16 %v483
      %v534 = vunpack.c.l.b16 %v484
      %v535 = vunpack.c.l.b16 %v485
      %v536 = vunpack.c.l.b16 %v486
      %v537 = vunpack.c.l.b16 %v487
      %v538 = vunpack.c.l.b16 %v488
      %v539 = vunpack.c.l.b16 %v489
      %v540 = vunpack.c.l.b16 %v490
      %v541 = vunpack.c.l.b16 %v491
      %v542 = vunpack.c.l.b16 %v492
      %v543 = vunpack.c.l.b16 %v493
      %v544 = vunpack.c.l.b16 %v494
      %v545 = vunpack.c.l.b16 %v495
      %v546 = vunpack.c.l.b16 %v496
      %v547 = vunpack.c.l.b16 %v497
      %v548 = vunpack.c.l.b16 %v498
      %v549 = vpack.c.b16 %v525, %v524
      %v550 = vpack.c.b16 %v527, %v526
      %v551 = vpack.c.b16 %v529, %v528
      %v552 = vpack.c.b16 %v531, %v530
      %v553 = vpack.c.b16 %v533, %v532
      %v554 = vpack.c.b16 %v535, %v534
      %v555 = vpack.c.b16 %v537, %v536
      %v556 = vpack.c.b16 %v539, %v538
      %v557 = vpack.c.b16 %v541, %v540
      %v558 = vpack.c.b16 %v543, %v542
      %v559 = vpack.c.b16 %v545, %v544
      %v560 = vpack.c.b16 %v547, %v546
      %v561 = vpack.c.b16 %v548, %v548
      %575 = vmatprep.subr.bf16.mxu0 0
      %576 = vmatpush1.bf16.msra.mxu0 %v321
      %577 = vmatprep.subr.bf16.mxu0 0
      %578 = vmatpush1.bf16.msra.mxu0 %v322
      %579 = vmatprep.subr.bf16.mxu0 0
      %580 = vmatpush1.bf16.msra.mxu0 %v323
      %581 = vmatprep.subr.bf16.mxu0 0
      %582 = vmatpush1.bf16.msra.mxu0 %v324
      %583 = vmatprep.subr.bf16.mxu0 0
      %584 = vmatpush1.bf16.msra.mxu0 %v325
      %585 = vmatprep.subr.bf16.mxu0 0
      %586 = vmatpush1.bf16.msra.mxu0 %v326
      %587 = vmatprep.subr.bf16.mxu0 0
      %588 = vmatpush1.bf16.msra.mxu0 %v327
      %589 = vmatprep.subr.bf16.mxu0 0
      %590 = vmatpush1.bf16.msra.mxu0 %v328
      %591 = vmatprep.subr.bf16.mxu0 0
      %592 = vmatpush1.bf16.msra.mxu0 0
      %593 = vmatprep.subr.bf16.mxu0 0
      %594 = vmatpush1.bf16.msra.mxu0 0
      %595 = vmatprep.subr.bf16.mxu0 0
      %596 = vmatpush1.bf16.msra.mxu0 0
      %597 = vmatprep.subr.bf16.mxu0 0
      %598 = vmatpush1.bf16.msra.mxu0 0
      %599 = vmatprep.subr.bf16.mxu0 0
      %600 = vmatpush1.bf16.msra.mxu0 0
      %601 = vmatprep.subr.bf16.mxu0 0
      %602 = vmatpush1.bf16.msra.mxu0 0
      %603 = vmatprep.subr.bf16.mxu0 0
      %604 = vmatpush1.bf16.msra.mxu0 0
      %605 = vmatprep.subr.bf16.mxu0 0
      %606 = vmatpush1.bf16.msra.mxu0 0
      %607 = vmatprep.mubr.bf16.mxu0 0
      %608 = vmatmul.mubr.bf16.gmra.mrb[0].mxu0 %v549
      %v609 = vpop.f32.mrb[0].mxu0
      %v610 = vadd.f32 0.0, %v609
      %v611 = vpop.f32.mrb[0].mxu0
      %v612 = vpop.f32.mrb[0].mxu0
      %v613 = vadd.f32 0.0, %v612
      %v614 = vpop.f32.mrb[0].mxu0
      %615 = vmatprep.mubr.bf16.mxu0 0
      %616 = vmatmul.mubr.bf16.gmra.mrb[0].mxu0 %v550
      %v617 = vpop.f32.mrb[0].mxu0
      %v618 = vadd.f32 0.0, %v617
      %v619 = vpop.f32.mrb[0].mxu0
      %v620 = vpop.f32.mrb[0].mxu0
      %v621 = vadd.f32 0.0, %v620
      %v622 = vpop.f32.mrb[0].mxu0
      %623 = vmatprep.mubr.bf16.mxu0 0
      %624 = vmatmul.mubr.bf16.gmra.mrb[0].mxu0 %v551
      %v625 = vpop.f32.mrb[0].mxu0
      %v626 = vadd.f32 0.0, %v625
      %v627 = vpop.f32.mrb[0].mxu0
      %v628 = vpop.f32.mrb[0].mxu0
      %v629 = vadd.f32 0.0, %v628
      %v630 = vpop.f32.mrb[0].mxu0
      %631 = vmatprep.mubr.bf16.mxu0 0
      %632 = vmatmul.mubr.bf16.gmra.mrb[0].mxu0 %v552
      %v633 = vpop.f32.mrb[0].mxu0
      %v634 = vadd.f32 0.0, %v633
      %v635 = vpop.f32.mrb[0].mxu0
      %v636 = vpop.f32.mrb[0].mxu0
      %v637 = vadd.f32 0.0, %v636
      %v638 = vpop.f32.mrb[0].mxu0
      %639 = vmatprep.mubr.bf16.mxu0 0
      %640 = vmatmul.mubr.bf16.gmra.mrb[0].mxu0 %v553
      %v641 = vpop.f32.mrb[0].mxu0
      %v642 = vadd.f32 0.0, %v641
      %v643 = vpop.f32.mrb[0].mxu0
      %v644 = vpop.f32.mrb[0].mxu0
      %v645 = vadd.f32 0.0, %v644
      %v646 = vpop.f32.mrb[0].mxu0
      %647 = vmatprep.mubr.bf16.mxu0 0
      %648 = vmatmul.mubr.bf16.gmra.mrb[0].mxu0 %v554
      %v649 = vpop.f32.mrb[0].mxu0
      %v650 = vadd.f32 0.0, %v649
      %v651 = vpop.f32.mrb[0].mxu0
      %v652 = vpop.f32.mrb[0].mxu0
      %v653 = vadd.f32 0.0, %v652
      %v654 = vpop.f32.mrb[0].mxu0
      %655 = vmatprep.mubr.bf16.mxu0 0
      %656 = vmatmul.mubr.bf16.gmra.mrb[0].mxu0 %v555
      %v657 = vpop.f32.mrb[0].mxu0
      %v658 = vadd.f32 0.0, %v657
      %v659 = vpop.f32.mrb[0].mxu0
      %v660 = vpop.f32.mrb[0].mxu0
      %v661 = vadd.f32 0.0, %v660
      %v662 = vpop.f32.mrb[0].mxu0
      %663 = vmatprep.mubr.bf16.mxu0 0
      %664 = vmatmul.mubr.bf16.gmra.mrb[0].mxu0 %v556
      %v665 = vpop.f32.mrb[0].mxu0
      %v666 = vadd.f32 0.0, %v665
      %v667 = vpop.f32.mrb[0].mxu0
      %v668 = vpop.f32.mrb[0].mxu0
      %v669 = vadd.f32 0.0, %v668
      %v670 = vpop.f32.mrb[0].mxu0
      %671 = vmatprep.mubr.bf16.mxu0 0
      %672 = vmatmul.mubr.bf16.gmra.mrb[0].mxu0 %v557
      %v673 = vpop.f32.mrb[0].mxu0
      %v674 = vadd.f32 0.0, %v673
      %v675 = vpop.f32.mrb[0].mxu0
      %v676 = vpop.f32.mrb[0].mxu0
      %v677 = vadd.f32 0.0, %v676
      %v678 = vpop.f32.mrb[0].mxu0
      %679 = vmatprep.mubr.bf16.mxu0 0
      %680 = vmatmul.mubr.bf16.gmra.mrb[0].mxu0 %v558
      %v681 = vpop.f32.mrb[0].mxu0
      %v682 = vadd.f32 0.0, %v681
      %v683 = vpop.f32.mrb[0].mxu0
      %v684 = vpop.f32.mrb[0].mxu0
      %v685 = vadd.f32 0.0, %v684
      %v686 = vpop.f32.mrb[0].mxu0
      %687 = vmatprep.mubr.bf16.mxu0 0
      %688 = vmatmul.mubr.bf16.gmra.mrb[0].mxu0 %v559
      %v689 = vpop.f32.mrb[0].mxu0
      %v690 = vadd.f32 0.0, %v689
      %v691 = vpop.f32.mrb[0].mxu0
      %v692 = vpop.f32.mrb[0].mxu0
      %v693 = vadd.f32 0.0, %v692
      %v694 = vpop.f32.mrb[0].mxu0
      %695 = vmatprep.mubr.bf16.mxu0 0
      %696 = vmatmul.mubr.bf16.gmra.mrb[0].mxu0 %v560
      %v697 = vpop.f32.mrb[0].mxu0
      %v698 = vadd.f32 0.0, %v697
      %v699 = vpop.f32.mrb[0].mxu0
      %v700 = vpop.f32.mrb[0].mxu0
      %v701 = vadd.f32 0.0, %v700
      %v702 = vpop.f32.mrb[0].mxu0
      %703 = vmatprep.mubr.bf16.mxu0 0
      %704 = vmatmul.mubr.bf16.gmra.mrb[0].mxu0 %v561
      %v705 = vpop.f32.mrb[0].mxu0
      %v706 = vadd.f32 0.0, %v705
      %v707 = vpop.f32.mrb[0].mxu0
      %v708 = vpop.f32.mrb[0].mxu0
      %v709 = vpop.f32.mrb[0].mxu0
      %710 = vdwg.mxu0
      %v711 = vmax.f32 %v372, %v610
      %v712 = vmax.f32 %v375, %v613
      %v713 = vmax.f32 %v380, %v618
      %v714 = vmax.f32 %v383, %v621
      %v715 = vmax.f32 %v388, %v626
      %v716 = vmax.f32 %v391, %v629
      %v717 = vmax.f32 %v396, %v634
      %v718 = vmax.f32 %v399, %v637
      %v719 = vmax.f32 %v404, %v642
      %v720 = vmax.f32 %v407, %v645
      %v721 = vmax.f32 %v412, %v650
      %v722 = vmax.f32 %v415, %v653
      %v723 = vmax.f32 %v420, %v658
      %v724 = vmax.f32 %v423, %v661
      %v725 = vmax.f32 %v428, %v666
      %v726 = vmax.f32 %v431, %v669
      %v727 = vmax.f32 %v436, %v674
      %v728 = vmax.f32 %v439, %v677
      %v729 = vmax.f32 %v444, %v682
      %v730 = vmax.f32 %v447, %v685
      %v731 = vmax.f32 %v452, %v690
      %v732 = vmax.f32 %v455, %v693
      %v733 = vmax.f32 %v460, %v698
      %v734 = vmax.f32 %v463, %v701
      %v735 = vmax.f32 %v468, %v706
      %s736 = scalar_lea.vmem %s165, 200
      %v737 = vld [vmem:[%s736] sm:$0xf]
      %v738 = vld [vmem:[%s736 + $0x4] sm:$0xf]
      %v739 = vld [vmem:[%s736 + $0x8] sm:$0xf]
      %v740 = vld [vmem:[%s736 + $0xc] sm:$0xf]
      %v741 = vld [vmem:[%s736 + $0x10] sm:$0xf]
      %v742 = vld [vmem:[%s736 + $0x14] sm:$0xf]
      %v743 = vld [vmem:[%s736 + $0x18] sm:$0xf]
      %v744 = vld [vmem:[%s736 + $0x1c] sm:$0xf]
      %v745 = vld [vmem:[%s736 + $0x20] sm:$0xf]
      %v746 = vld [vmem:[%s736 + $0x24] sm:$0xf]
      %v747 = vld [vmem:[%s736 + $0x28] sm:$0xf]
      %v748 = vld [vmem:[%s736 + $0x2c] sm:$0xf]
      %v749 = vld [vmem:[%s736 + $0x30] sm:$0xf]
      %v750 = vld [vmem:[%s736 + $0x34] sm:$0xf]
      %v751 = vld [vmem:[%s736 + $0x38] sm:$0xf]
      %v752 = vld [vmem:[%s736 + $0x3c] sm:$0xf]
      %v753 = vld [vmem:[%s736 + $0x40] sm:$0xf]
      %v754 = vld [vmem:[%s736 + $0x44] sm:$0xf]
      %v755 = vld [vmem:[%s736 + $0x48] sm:$0xf]
      %v756 = vld [vmem:[%s736 + $0x4c] sm:$0xf]
      %v757 = vld [vmem:[%s736 + $0x50] sm:$0xf]
      %v758 = vld [vmem:[%s736 + $0x54] sm:$0xf]
      %v759 = vld [vmem:[%s736 + $0x58] sm:$0xf]
      %v760 = vld [vmem:[%s736 + $0x5c] sm:$0xf]
      %v761 = vld [vmem:[%s736 + $0x60] sm:$0x3]
      %v787 = vunpack.c.l.b16 %v737
      %v788 = vunpack.c.l.b16 %v738
      %v789 = vunpack.c.l.b16 %v739
      %v790 = vunpack.c.l.b16 %v740
      %v791 = vunpack.c.l.b16 %v741
      %v792 = vunpack.c.l.b16 %v742
      %v793 = vunpack.c.l.b16 %v743
      %v794 = vunpack.c.l.b16 %v744
      %v795 = vunpack.c.l.b16 %v745
      %v796 = vunpack.c.l.b16 %v746
      %v797 = vunpack.c.l.b16 %v747
      %v798 = vunpack.c.l.b16 %v748
      %v799 = vunpack.c.l.b16 %v749
      %v800 = vunpack.c.l.b16 %v750
      %v801 = vunpack.c.l.b16 %v751
      %v802 = vunpack.c.l.b16 %v752
      %v803 = vunpack.c.l.b16 %v753
      %v804 = vunpack.c.l.b16 %v754
      %v805 = vunpack.c.l.b16 %v755
      %v806 = vunpack.c.l.b16 %v756
      %v807 = vunpack.c.l.b16 %v757
      %v808 = vunpack.c.l.b16 %v758
      %v809 = vunpack.c.l.b16 %v759
      %v810 = vunpack.c.l.b16 %v760
      %v811 = vunpack.c.l.b16 %v761
      %v812 = vpack.c.b16 %v788, %v787
      %v813 = vpack.c.b16 %v790, %v789
      %v814 = vpack.c.b16 %v792, %v791
      %v815 = vpack.c.b16 %v794, %v793
      %v816 = vpack.c.b16 %v796, %v795
      %v817 = vpack.c.b16 %v798, %v797
      %v818 = vpack.c.b16 %v800, %v799
      %v819 = vpack.c.b16 %v802, %v801
      %v820 = vpack.c.b16 %v804, %v803
      %v821 = vpack.c.b16 %v806, %v805
      %v822 = vpack.c.b16 %v808, %v807
      %v823 = vpack.c.b16 %v810, %v809
      %v824 = vpack.c.b16 %v811, %v811
      %838 = vmatprep.subr.bf16.mxu0 0
      %839 = vmatpush1.bf16.msra.mxu0 %v321
      %840 = vmatprep.subr.bf16.mxu0 0
      %841 = vmatpush1.bf16.msra.mxu0 %v322
      %842 = vmatprep.subr.bf16.mxu0 0
      %843 = vmatpush1.bf16.msra.mxu0 %v323
      %844 = vmatprep.subr.bf16.mxu0 0
      %845 = vmatpush1.bf16.msra.mxu0 %v324
      %846 = vmatprep.subr.bf16.mxu0 0
      %847 = vmatpush1.bf16.msra.mxu0 %v325
      %848 = vmatprep.subr.bf16.mxu0 0
      %849 = vmatpush1.bf16.msra.mxu0 %v326
      %850 = vmatprep.subr.bf16.mxu0 0
      %851 = vmatpush1.bf16.msra.mxu0 %v327
      %852 = vmatprep.subr.bf16.mxu0 0
      %853 = vmatpush1.bf16.msra.mxu0 %v328
      %854 = vmatprep.subr.bf16.mxu0 0
      %855 = vmatpush1.bf16.msra.mxu0 0
      %856 = vmatprep.subr.bf16.mxu0 0
      %857 = vmatpush1.bf16.msra.mxu0 0
      %858 = vmatprep.subr.bf16.mxu0 0
      %859 = vmatpush1.bf16.msra.mxu0 0
      %860 = vmatprep.subr.bf16.mxu0 0
      %861 = vmatpush1.bf16.msra.mxu0 0
      %862 = vmatprep.subr.bf16.mxu0 0
      %863 = vmatpush1.bf16.msra.mxu0 0
      %864 = vmatprep.subr.bf16.mxu0 0
      %865 = vmatpush1.bf16.msra.mxu0 0
      %866 = vmatprep.subr.bf16.mxu0 0
      %867 = vmatpush1.bf16.msra.mxu0 0
      %868 = vmatprep.subr.bf16.mxu0 0
      %869 = vmatpush1.bf16.msra.mxu0 0
      %870 = vmatprep.mubr.bf16.mxu0 0
      %871 = vmatmul.mubr.bf16.gmra.mrb[0].mxu0 %v812
      %v872 = vpop.f32.mrb[0].mxu0
      %v873 = vadd.f32 0.0, %v872
      %v874 = vpop.f32.mrb[0].mxu0
      %v875 = vpop.f32.mrb[0].mxu0
      %v876 = vadd.f32 0.0, %v875
      %v877 = vpop.f32.mrb[0].mxu0
      %878 = vmatprep.mubr.bf16.mxu0 0
      %879 = vmatmul.mubr.bf16.gmra.mrb[0].mxu0 %v813
      %v880 = vpop.f32.mrb[0].mxu0
      %v881 = vadd.f32 0.0, %v880
      %v882 = vpop.f32.mrb[0].mxu0
      %v883 = vpop.f32.mrb[0].mxu0
      %v884 = vadd.f32 0.0, %v883
      %v885 = vpop.f32.mrb[0].mxu0
      %886 = vmatprep.mubr.bf16.mxu0 0
      %887 = vmatmul.mubr.bf16.gmra.mrb[0].mxu0 %v814
      %v888 = vpop.f32.mrb[0].mxu0
      %v889 = vadd.f32 0.0, %v888
      %v890 = vpop.f32.mrb[0].mxu0
      %v891 = vpop.f32.mrb[0].mxu0
      %v892 = vadd.f32 0.0, %v891
      %v893 = vpop.f32.mrb[0].mxu0
      %894 = vmatprep.mubr.bf16.mxu0 0
      %895 = vmatmul.mubr.bf16.gmra.mrb[0].mxu0 %v815
      %v896 = vpop.f32.mrb[0].mxu0
      %v897 = vadd.f32 0.0, %v896
      %v898 = vpop.f32.mrb[0].mxu0
      %v899 = vpop.f32.mrb[0].mxu0
      %v900 = vadd.f32 0.0, %v899
      %v901 = vpop.f32.mrb[0].mxu0
      %902 = vmatprep.mubr.bf16.mxu0 0
      %903 = vmatmul.mubr.bf16.gmra.mrb[0].mxu0 %v816
      %v904 = vpop.f32.mrb[0].mxu0
      %v905 = vadd.f32 0.0, %v904
      %v906 = vpop.f32.mrb[0].mxu0
      %v907 = vpop.f32.mrb[0].mxu0
      %v908 = vadd.f32 0.0, %v907
      %v909 = vpop.f32.mrb[0].mxu0
      %910 = vmatprep.mubr.bf16.mxu0 0
      %911 = vmatmul.mubr.bf16.gmra.mrb[0].mxu0 %v817
      %v912 = vpop.f32.mrb[0].mxu0
      %v913 = vadd.f32 0.0, %v912
      %v914 = vpop.f32.mrb[0].mxu0
      %v915 = vpop.f32.mrb[0].mxu0
      %v916 = vadd.f32 0.0, %v915
      %v917 = vpop.f32.mrb[0].mxu0
      %918 = vmatprep.mubr.bf16.mxu0 0
      %919 = vmatmul.mubr.bf16.gmra.mrb[0].mxu0 %v818
      %v920 = vpop.f32.mrb[0].mxu0
      %v921 = vadd.f32 0.0, %v920
      %v922 = vpop.f32.mrb[0].mxu0
      %v923 = vpop.f32.mrb[0].mxu0
      %v924 = vadd.f32 0.0, %v923
      %v925 = vpop.f32.mrb[0].mxu0
      %926 = vmatprep.mubr.bf16.mxu0 0
      %927 = vmatmul.mubr.bf16.gmra.mrb[0].mxu0 %v819
      %v928 = vpop.f32.mrb[0].mxu0
      %v929 = vadd.f32 0.0, %v928
      %v930 = vpop.f32.mrb[0].mxu0
      %v931 = vpop.f32.mrb[0].mxu0
      %v932 = vadd.f32 0.0, %v931
      %v933 = vpop.f32.mrb[0].mxu0
      %934 = vmatprep.mubr.bf16.mxu0 0
      %935 = vmatmul.mubr.bf16.gmra.mrb[0].mxu0 %v820
      %v936 = vpop.f32.mrb[0].mxu0
      %v937 = vadd.f32 0.0, %v936
      %v938 = vpop.f32.mrb[0].mxu0
      %v939 = vpop.f32.mrb[0].mxu0
      %v940 = vadd.f32 0.0, %v939
      %v941 = vpop.f32.mrb[0].mxu0
      %942 = vmatprep.mubr.bf16.mxu0 0
      %943 = vmatmul.mubr.bf16.gmra.mrb[0].mxu0 %v821
      %v944 = vpop.f32.mrb[0].mxu0
      %v945 = vadd.f32 0.0, %v944
      %v946 = vpop.f32.mrb[0].mxu0
      %v947 = vpop.f32.mrb[0].mxu0
      %v948 = vadd.f32 0.0, %v947
      %v949 = vpop.f32.mrb[0].mxu0
      %950 = vmatprep.mubr.bf16.mxu0 0
      %951 = vmatmul.mubr.bf16.gmra.mrb[0].mxu0 %v822
      %v952 = vpop.f32.mrb[0].mxu0
      %v953 = vadd.f32 0.0, %v952
      %v954 = vpop.f32.mrb[0].mxu0
      %v955 = vpop.f32.mrb[0].mxu0
      %v956 = vadd.f32 0.0, %v955
      %v957 = vpop.f32.mrb[0].mxu0
      %958 = vmatprep.mubr.bf16.mxu0 0
      %959 = vmatmul.mubr.bf16.gmra.mrb[0].mxu0 %v823
      %v960 = vpop.f32.mrb[0].mxu0
      %v961 = vadd.f32 0.0, %v960
      %v962 = vpop.f32.mrb[0].mxu0
      %v963 = vpop.f32.mrb[0].mxu0
      %v964 = vadd.f32 0.0, %v963
      %v965 = vpop.f32.mrb[0].mxu0
      %966 = vmatprep.mubr.bf16.mxu0 0
      %967 = vmatmul.mubr.bf16.gmra.mrb[0].mxu0 %v824
      %v968 = vpop.f32.mrb[0].mxu0
      %v969 = vadd.f32 0.0, %v968
      %v970 = vpop.f32.mrb[0].mxu0
      %v971 = vpop.f32.mrb[0].mxu0
      %v972 = vpop.f32.mrb[0].mxu0
      %973 = vdwg.mxu0
      %s974 = scalar_lea.vmem %s165, 300
      %v975 = vld [vmem:[%s974] sm:$0xf]
      %v976 = vld [vmem:[%s974 + $0x4] sm:$0xf]
      %v977 = vld [vmem:[%s974 + $0x8] sm:$0xf]
      %v978 = vld [vmem:[%s974 + $0xc] sm:$0xf]
      %v979 = vld [vmem:[%s974 + $0x10] sm:$0xf]
      %v980 = vld [vmem:[%s974 + $0x14] sm:$0xf]
      %v981 = vld [vmem:[%s974 + $0x18] sm:$0xf]
      %v982 = vld [vmem:[%s974 + $0x1c] sm:$0xf]
      %v983 = vld [vmem:[%s974 + $0x20] sm:$0xf]
      %v984 = vld [vmem:[%s974 + $0x24] sm:$0xf]
      %v985 = vld [vmem:[%s974 + $0x28] sm:$0xf]
      %v986 = vld [vmem:[%s974 + $0x2c] sm:$0xf]
      %v987 = vld [vmem:[%s974 + $0x30] sm:$0xf]
      %v988 = vld [vmem:[%s974 + $0x34] sm:$0xf]
      %v989 = vld [vmem:[%s974 + $0x38] sm:$0xf]
      %v990 = vld [vmem:[%s974 + $0x3c] sm:$0xf]
      %v991 = vld [vmem:[%s974 + $0x40] sm:$0xf]
      %v992 = vld [vmem:[%s974 + $0x44] sm:$0xf]
      %v993 = vld [vmem:[%s974 + $0x48] sm:$0xf]
      %v994 = vld [vmem:[%s974 + $0x4c] sm:$0xf]
      %v995 = vld [vmem:[%s974 + $0x50] sm:$0xf]
      %v996 = vld [vmem:[%s974 + $0x54] sm:$0xf]
      %v997 = vld [vmem:[%s974 + $0x58] sm:$0xf]
      %v998 = vld [vmem:[%s974 + $0x5c] sm:$0xf]
      %v999 = vld [vmem:[%s974 + $0x60] sm:$0x3]
      %v1025 = vunpack.c.l.b16 %v975
      %v1026 = vunpack.c.l.b16 %v976
      %v1027 = vunpack.c.l.b16 %v977
      %v1028 = vunpack.c.l.b16 %v978
      %v1029 = vunpack.c.l.b16 %v979
      %v1030 = vunpack.c.l.b16 %v980
      %v1031 = vunpack.c.l.b16 %v981
      %v1032 = vunpack.c.l.b16 %v982
      %v1033 = vunpack.c.l.b16 %v983
      %v1034 = vunpack.c.l.b16 %v984
      %v1035 = vunpack.c.l.b16 %v985
      %v1036 = vunpack.c.l.b16 %v986
      %v1037 = vunpack.c.l.b16 %v987
      %v1038 = vunpack.c.l.b16 %v988
      %v1039 = vunpack.c.l.b16 %v989
      %v1040 = vunpack.c.l.b16 %v990
      %v1041 = vunpack.c.l.b16 %v991
      %v1042 = vunpack.c.l.b16 %v992
      %v1043 = vunpack.c.l.b16 %v993
      %v1044 = vunpack.c.l.b16 %v994
      %v1045 = vunpack.c.l.b16 %v995
      %v1046 = vunpack.c.l.b16 %v996
      %v1047 = vunpack.c.l.b16 %v997
      %v1048 = vunpack.c.l.b16 %v998
      %v1049 = vunpack.c.l.b16 %v999
      %v1050 = vpack.c.b16 %v1026, %v1025
      %v1051 = vpack.c.b16 %v1028, %v1027
      %v1052 = vpack.c.b16 %v1030, %v1029
      %v1053 = vpack.c.b16 %v1032, %v1031
      %v1054 = vpack.c.b16 %v1034, %v1033
      %v1055 = vpack.c.b16 %v1036, %v1035
      %v1056 = vpack.c.b16 %v1038, %v1037
      %v1057 = vpack.c.b16 %v1040, %v1039
      %v1058 = vpack.c.b16 %v1042, %v1041
      %v1059 = vpack.c.b16 %v1044, %v1043
      %v1060 = vpack.c.b16 %v1046, %v1045
      %v1061 = vpack.c.b16 %v1048, %v1047
      %v1062 = vpack.c.b16 %v1049, %v1049
      %1076 = vmatprep.subr.bf16.mxu0 0
      %1077 = vmatpush1.bf16.msra.mxu0 %v321
      %1078 = vmatprep.subr.bf16.mxu0 0
      %1079 = vmatpush1.bf16.msra.mxu0 %v322
      %1080 = vmatprep.subr.bf16.mxu0 0
      %1081 = vmatpush1.bf16.msra.mxu0 %v323
      %1082 = vmatprep.subr.bf16.mxu0 0
      %1083 = vmatpush1.bf16.msra.mxu0 %v324
      %1084 = vmatprep.subr.bf16.mxu0 0
      %1085 = vmatpush1.bf16.msra.mxu0 %v325
      %1086 = vmatprep.subr.bf16.mxu0 0
      %1087 = vmatpush1.bf16.msra.mxu0 %v326
      %1088 = vmatprep.subr.bf16.mxu0 0
      %1089 = vmatpush1.bf16.msra.mxu0 %v327
      %1090 = vmatprep.subr.bf16.mxu0 0
      %1091 = vmatpush1.bf16.msra.mxu0 %v328
      %1092 = vmatprep.subr.bf16.mxu0 0
      %1093 = vmatpush1.bf16.msra.mxu0 0
      %1094 = vmatprep.subr.bf16.mxu0 0
      %1095 = vmatpush1.bf16.msra.mxu0 0
      %1096 = vmatprep.subr.bf16.mxu0 0
      %1097 = vmatpush1.bf16.msra.mxu0 0
      %1098 = vmatprep.subr.bf16.mxu0 0
      %1099 = vmatpush1.bf16.msra.mxu0 0
      %1100 = vmatprep.subr.bf16.mxu0 0
      %1101 = vmatpush1.bf16.msra.mxu0 0
      %1102 = vmatprep.subr.bf16.mxu0 0
      %1103 = vmatpush1.bf16.msra.mxu0 0
      %1104 = vmatprep.subr.bf16.mxu0 0
      %1105 = vmatpush1.bf16.msra.mxu0 0
      %1106 = vmatprep.subr.bf16.mxu0 0
      %1107 = vmatpush1.bf16.msra.mxu0 0
      %1108 = vmatprep.mubr.bf16.mxu0 0
      %1109 = vmatmul.mubr.bf16.gmra.mrb[0].mxu0 %v1050
      %v1110 = vpop.f32.mrb[0].mxu0
      %v1111 = vadd.f32 0.0, %v1110
      %v1112 = vpop.f32.mrb[0].mxu0
      %v1113 = vpop.f32.mrb[0].mxu0
      %v1114 = vadd.f32 0.0, %v1113
      %v1115 = vpop.f32.mrb[0].mxu0
      %1116 = vmatprep.mubr.bf16.mxu0 0
      %1117 = vmatmul.mubr.bf16.gmra.mrb[0].mxu0 %v1051
      %v1118 = vpop.f32.mrb[0].mxu0
      %v1119 = vadd.f32 0.0, %v1118
      %v1120 = vpop.f32.mrb[0].mxu0
      %v1121 = vpop.f32.mrb[0].mxu0
      %v1122 = vadd.f32 0.0, %v1121
      %v1123 = vpop.f32.mrb[0].mxu0
      %1124 = vmatprep.mubr.bf16.mxu0 0
      %1125 = vmatmul.mubr.bf16.gmra.mrb[0].mxu0 %v1052
      %v1126 = vpop.f32.mrb[0].mxu0
      %v1127 = vadd.f32 0.0, %v1126
      %v1128 = vpop.f32.mrb[0].mxu0
      %v1129 = vpop.f32.mrb[0].mxu0
      %v1130 = vadd.f32 0.0, %v1129
      %v1131 = vpop.f32.mrb[0].mxu0
      %1132 = vmatprep.mubr.bf16.mxu0 0
      %1133 = vmatmul.mubr.bf16.gmra.mrb[0].mxu0 %v1053
      %v1134 = vpop.f32.mrb[0].mxu0
      %v1135 = vadd.f32 0.0, %v1134
      %v1136 = vpop.f32.mrb[0].mxu0
      %v1137 = vpop.f32.mrb[0].mxu0
      %v1138 = vadd.f32 0.0, %v1137
      %v1139 = vpop.f32.mrb[0].mxu0
      %1140 = vmatprep.mubr.bf16.mxu0 0
      %1141 = vmatmul.mubr.bf16.gmra.mrb[0].mxu0 %v1054
      %v1142 = vpop.f32.mrb[0].mxu0
      %v1143 = vadd.f32 0.0, %v1142
      %v1144 = vpop.f32.mrb[0].mxu0
      %v1145 = vpop.f32.mrb[0].mxu0
      %v1146 = vadd.f32 0.0, %v1145
      %v1147 = vpop.f32.mrb[0].mxu0
      %1148 = vmatprep.mubr.bf16.mxu0 0
      %1149 = vmatmul.mubr.bf16.gmra.mrb[0].mxu0 %v1055
      %v1150 = vpop.f32.mrb[0].mxu0
      %v1151 = vadd.f32 0.0, %v1150
      %v1152 = vpop.f32.mrb[0].mxu0
      %v1153 = vpop.f32.mrb[0].mxu0
      %v1154 = vadd.f32 0.0, %v1153
      %v1155 = vpop.f32.mrb[0].mxu0
      %1156 = vmatprep.mubr.bf16.mxu0 0
      %1157 = vmatmul.mubr.bf16.gmra.mrb[0].mxu0 %v1056
      %v1158 = vpop.f32.mrb[0].mxu0
      %v1159 = vadd.f32 0.0, %v1158
      %v1160 = vpop.f32.mrb[0].mxu0
      %v1161 = vpop.f32.mrb[0].mxu0
      %v1162 = vadd.f32 0.0, %v1161
      %v1163 = vpop.f32.mrb[0].mxu0
      %1164 = vmatprep.mubr.bf16.mxu0 0
      %1165 = vmatmul.mubr.bf16.gmra.mrb[0].mxu0 %v1057
      %v1166 = vpop.f32.mrb[0].mxu0
      %v1167 = vadd.f32 0.0, %v1166
      %v1168 = vpop.f32.mrb[0].mxu0
      %v1169 = vpop.f32.mrb[0].mxu0
      %v1170 = vadd.f32 0.0, %v1169
      %v1171 = vpop.f32.mrb[0].mxu0
      %1172 = vmatprep.mubr.bf16.mxu0 0
      %1173 = vmatmul.mubr.bf16.gmra.mrb[0].mxu0 %v1058
      %v1174 = vpop.f32.mrb[0].mxu0
      %v1175 = vadd.f32 0.0, %v1174
      %v1176 = vpop.f32.mrb[0].mxu0
      %v1177 = vpop.f32.mrb[0].mxu0
      %v1178 = vadd.f32 0.0, %v1177
      %v1179 = vpop.f32.mrb[0].mxu0
      %1180 = vmatprep.mubr.bf16.mxu0 0
      %1181 = vmatmul.mubr.bf16.gmra.mrb[0].mxu0 %v1059
      %v1182 = vpop.f32.mrb[0].mxu0
      %v1183 = vadd.f32 0.0, %v1182
      %v1184 = vpop.f32.mrb[0].mxu0
      %v1185 = vpop.f32.mrb[0].mxu0
      %v1186 = vadd.f32 0.0, %v1185
      %v1187 = vpop.f32.mrb[0].mxu0
      %1188 = vmatprep.mubr.bf16.mxu0 0
      %1189 = vmatmul.mubr.bf16.gmra.mrb[0].mxu0 %v1060
      %v1190 = vpop.f32.mrb[0].mxu0
      %v1191 = vadd.f32 0.0, %v1190
      %v1192 = vpop.f32.mrb[0].mxu0
      %v1193 = vpop.f32.mrb[0].mxu0
      %v1194 = vadd.f32 0.0, %v1193
      %v1195 = vpop.f32.mrb[0].mxu0
      %1196 = vmatprep.mubr.bf16.mxu0 0
      %1197 = vmatmul.mubr.bf16.gmra.mrb[0].mxu0 %v1061
      %v1198 = vpop.f32.mrb[0].mxu0
      %v1199 = vadd.f32 0.0, %v1198
      %v1200 = vpop.f32.mrb[0].mxu0
      %v1201 = vpop.f32.mrb[0].mxu0
      %v1202 = vadd.f32 0.0, %v1201
      %v1203 = vpop.f32.mrb[0].mxu0
      %1204 = vmatprep.mubr.bf16.mxu0 0
      %1205 = vmatmul.mubr.bf16.gmra.mrb[0].mxu0 %v1062
      %v1206 = vpop.f32.mrb[0].mxu0
      %v1207 = vadd.f32 0.0, %v1206
      %v1208 = vpop.f32.mrb[0].mxu0
      %v1209 = vpop.f32.mrb[0].mxu0
      %v1210 = vpop.f32.mrb[0].mxu0
      %1211 = vdwg.mxu0
      %v1212 = vmax.f32 %v873, %v1111
      %v1213 = vmax.f32 %v876, %v1114
      %v1214 = vmax.f32 %v881, %v1119
      %v1215 = vmax.f32 %v884, %v1122
      %v1216 = vmax.f32 %v889, %v1127
      %v1217 = vmax.f32 %v892, %v1130
      %v1218 = vmax.f32 %v897, %v1135
      %v1219 = vmax.f32 %v900, %v1138
      %v1220 = vmax.f32 %v905, %v1143
      %v1221 = vmax.f32 %v908, %v1146
      %v1222 = vmax.f32 %v913, %v1151
      %v1223 = vmax.f32 %v916, %v1154
      %v1224 = vmax.f32 %v921, %v1159
      %v1225 = vmax.f32 %v924, %v1162
      %v1226 = vmax.f32 %v929, %v1167
      %v1227 = vmax.f32 %v932, %v1170
      %v1228 = vmax.f32 %v937, %v1175
      %v1229 = vmax.f32 %v940, %v1178
      %v1230 = vmax.f32 %v945, %v1183
      %v1231 = vmax.f32 %v948, %v1186
      %v1232 = vmax.f32 %v953, %v1191
      %v1233 = vmax.f32 %v956, %v1194
      %v1234 = vmax.f32 %v961, %v1199
      %v1235 = vmax.f32 %v964, %v1202
      %v1236 = vmax.f32 %v969, %v1207
      %v1237 = vmax.f32 %v711, %v1212
      %v1238 = vmax.f32 %v712, %v1213
      %v1239 = vmax.f32 %v713, %v1214
      %v1240 = vmax.f32 %v714, %v1215
      %v1241 = vmax.f32 %v715, %v1216
      %v1242 = vmax.f32 %v716, %v1217
      %v1243 = vmax.f32 %v717, %v1218
      %v1244 = vmax.f32 %v718, %v1219
      %v1245 = vmax.f32 %v719, %v1220
      %v1246 = vmax.f32 %v720, %v1221
      %v1247 = vmax.f32 %v721, %v1222
      %v1248 = vmax.f32 %v722, %v1223
      %v1249 = vmax.f32 %v723, %v1224
      %v1250 = vmax.f32 %v724, %v1225
      %v1251 = vmax.f32 %v725, %v1226
      %v1252 = vmax.f32 %v726, %v1227
      %v1253 = vmax.f32 %v727, %v1228
      %v1254 = vmax.f32 %v728, %v1229
      %v1255 = vmax.f32 %v729, %v1230
      %v1256 = vmax.f32 %v730, %v1231
      %v1257 = vmax.f32 %v731, %v1232
      %v1258 = vmax.f32 %v732, %v1233
      %v1259 = vmax.f32 %v733, %v1234
      %v1260 = vmax.f32 %v734, %v1235
      %v1261 = vmax.f32 %v735, %v1236
      %v1262 = vld [vmem:[%s2] sm:$0x1]
      %v1264 = vlaneseq
      %v1265 = vshrl.u32 %v1264, 7
      %v1266 = vsub.s32 0, %v1265
      %v1267 = vrot.slane %v1262, %v1266
      %v1269 = vadd.f32 %v1237, %v1267
      %v1270 = vadd.f32 %v1238, %v1267
      %v1271 = vadd.f32 %v1239, %v1267
      %v1272 = vadd.f32 %v1240, %v1267
      %v1273 = vadd.f32 %v1241, %v1267
      %v1274 = vadd.f32 %v1242, %v1267
      %v1275 = vadd.f32 %v1243, %v1267
      %v1276 = vadd.f32 %v1244, %v1267
      %v1277 = vadd.f32 %v1245, %v1267
      %v1278 = vadd.f32 %v1246, %v1267
      %v1279 = vadd.f32 %v1247, %v1267
      %v1280 = vadd.f32 %v1248, %v1267
      %v1281 = vadd.f32 %v1249, %v1267
      %v1282 = vadd.f32 %v1250, %v1267
      %v1283 = vadd.f32 %v1251, %v1267
      %v1284 = vadd.f32 %v1252, %v1267
      %v1285 = vadd.f32 %v1253, %v1267
      %v1286 = vadd.f32 %v1254, %v1267
      %v1287 = vadd.f32 %v1255, %v1267
      %v1288 = vadd.f32 %v1256, %v1267
      %v1289 = vadd.f32 %v1257, %v1267
      %v1290 = vadd.f32 %v1258, %v1267
      %v1291 = vadd.f32 %v1259, %v1267
      %v1292 = vadd.f32 %v1260, %v1267
      %v1293 = vadd.f32 %v1261, %v1267
      %v1294 = vmax.f32 %v1269, 0.0
      %v1295 = vmax.f32 %v1270, 0.0
      %v1296 = vmax.f32 %v1271, 0.0
      %v1297 = vmax.f32 %v1272, 0.0
      %v1298 = vmax.f32 %v1273, 0.0
      %v1299 = vmax.f32 %v1274, 0.0
      %v1300 = vmax.f32 %v1275, 0.0
      %v1301 = vmax.f32 %v1276, 0.0
      %v1302 = vmax.f32 %v1277, 0.0
      %v1303 = vmax.f32 %v1278, 0.0
      %v1304 = vmax.f32 %v1279, 0.0
      %v1305 = vmax.f32 %v1280, 0.0
      %v1306 = vmax.f32 %v1281, 0.0
      %v1307 = vmax.f32 %v1282, 0.0
      %v1308 = vmax.f32 %v1283, 0.0
      %v1309 = vmax.f32 %v1284, 0.0
      %v1310 = vmax.f32 %v1285, 0.0
      %v1311 = vmax.f32 %v1286, 0.0
      %v1312 = vmax.f32 %v1287, 0.0
      %v1313 = vmax.f32 %v1288, 0.0
      %v1314 = vmax.f32 %v1289, 0.0
      %v1315 = vmax.f32 %v1290, 0.0
      %v1316 = vmax.f32 %v1291, 0.0
      %v1317 = vmax.f32 %v1292, 0.0
      %v1318 = vmax.f32 %v1293, 0.0
      %1319 = vst [vmem:[%s170] sm:$0xff] %v1294
      %1320 = vst [vmem:[%s170 + $0x8] sm:$0xff] %v1295
      %1321 = vst [vmem:[%s170 + $0x10] sm:$0xff] %v1296
      %1322 = vst [vmem:[%s170 + $0x18] sm:$0xff] %v1297
      %1323 = vst [vmem:[%s170 + $0x20] sm:$0xff] %v1298
      %1324 = vst [vmem:[%s170 + $0x28] sm:$0xff] %v1299
      %1325 = vst [vmem:[%s170 + $0x30] sm:$0xff] %v1300
      %1326 = vst [vmem:[%s170 + $0x38] sm:$0xff] %v1301
      %1327 = vst [vmem:[%s170 + $0x40] sm:$0xff] %v1302
      %1328 = vst [vmem:[%s170 + $0x48] sm:$0xff] %v1303
      %1329 = vst [vmem:[%s170 + $0x50] sm:$0xff] %v1304
      %1330 = vst [vmem:[%s170 + $0x58] sm:$0xff] %v1305
      %1331 = vst [vmem:[%s170 + $0x60] sm:$0xff] %v1306
      %1332 = vst [vmem:[%s170 + $0x68] sm:$0xff] %v1307
      %1333 = vst [vmem:[%s170 + $0x70] sm:$0xff] %v1308
      %1334 = vst [vmem:[%s170 + $0x78] sm:$0xff] %v1309
      %1335 = vst [vmem:[%s170 + $0x80] sm:$0xff] %v1310
      %1336 = vst [vmem:[%s170 + $0x88] sm:$0xff] %v1311
      %1337 = vst [vmem:[%s170 + $0x90] sm:$0xff] %v1312
      %1338 = vst [vmem:[%s170 + $0x98] sm:$0xff] %v1313
      %1339 = vst [vmem:[%s170 + $0xa0] sm:$0xff] %v1314
      %1340 = vst [vmem:[%s170 + $0xa8] sm:$0xff] %v1315
      %1341 = vst [vmem:[%s170 + $0xb0] sm:$0xff] %v1316
      %1342 = vst [vmem:[%s170 + $0xb8] sm:$0xff] %v1317
      %1343 = vst [vmem:[%s170 + $0xc0] sm:$0xf] %v1318
      %p1344 = scmp.lt.s32.totalorder %s14, 1
      %s1345 = scalar_select %p1344, %s14, 1
      %s1346 = smul.addr %s1345, 25
      %s1347 = smul.addr %s1346, 8
      %s1348 = scalar_lea.vmem %s3, %s1347
      // Predicated region
      $region33: #{lenet_forward.3} parent=31 // pred_check
        %p1349 = pneg %p100
      $region34: #{lenet_forward.3} parent=31 // pred_check_branch
        %1351 = sbr.rel (%p1349) target = $region36
      $region35: #{lenet_forward.3} parent=31 // pred_region
        _
      $region36: #{lenet_forward.3} parent=31 // pred_fallthru
        _
    $region32: #{lenet_forward.3} parent=5 // pred_fallthru
      _
    %p1352 = scmp.le.s32.totalorder 2, %s9
    // Predicated region
    $region37: #{lenet_forward.3} parent=5 // pred_check
      %p1353 = pneg %p1352
    $region38: #{lenet_forward.3} parent=5 // pred_check_branch
      %1355 = sbr.rel (%p1353) target = $region40
    $region39: #{lenet_forward.3} parent=5 // pred_region
      %s1356 = ssub.s32 %s9, 2
      // Predicated region
      $region41: #{lenet_forward.3} parent=39 // pred_check
        %p1357 = pneg %p106
      $region42: #{lenet_forward.3} parent=39 // pred_check_branch
        %1359 = sbr.rel (%p1357) target = $region44
      $region43: #{lenet_forward.3} parent=39 // pred_region
        %p1360 = scmp.lt.s32.totalorder %s15, 1
        %s1361 = scalar_select %p1360, %s15, 1
        %s1362 = smul.addr %s1361, 25
        %s1363 = smul.addr %s1362, 8
        %s1364 = scalar_lea.vmem %s3, %s1363
      $region44: #{lenet_forward.3} parent=39 // pred_fallthru
        _
    $region40: #{lenet_forward.3} parent=5 // pred_fallthru
      _
  $region6: #{lenet_forward.3} parent=0 // loop_footer
    %s13 = sadd.s32 1, %s9
  $region7: #{lenet_forward.3} parent=0 // loop_footer_branch
    %8 = sbr.rel target = $region3
  $region8: #{lenet_forward.3} parent=0 // loop_exit
    _

// kernel: lenet_forward.4
$region0: #{lenet_forward.4}
  #allocation0 [shape = 'u32[]', space=smem, size = 0x4, offset = 0x4, fixed_abs, tag = 'smem constant byte address 0x4 - core index']
  #allocation1 [shape = 'u32[144,128]{1,0:T(1,128)}', space=vmem, size = 0x12000, scoped, tag = 'internal scratch']
  %s0 = inlined_call_operand.vmem [shape: bf16[2,4,25,256], index: 0, kind: input, shape index: {}]
  %s1 = inlined_call_operand.vmem [shape: bf16[256,128], index: 1, kind: input, shape index: {}]
  %s2 = inlined_call_operand.vmem [shape: f32[1,128], index: 2, kind: input, shape index: {}]
  %s3 = inlined_call_operand.vmem [shape: f32[2,25,128], index: 3, kind: output, shape index: {}]
  %s4 = sld [smem:[#allocation0]]
  $region45: #{lenet_forward.4} parent=0
    _
  %s6 = ssub.s32 1, %s4
  %s7 = scalar_select 0, %s6, %s4
  loop: start=0, step=1, limit=4
  $region2: #{lenet_forward.4} parent=0 // loop_pre_header
    _
  $region3: #{lenet_forward.4} parent=0 // loop_header
    %s9 = sphi 0, %s13
    %p10 = scmp.ge.s32.totalorder %s9, 4
    %s19 = sphi 0, %s21
    %s22 = sphi 0, %s19
    %s23 = sphi 0, %s22
    %s39 = sphi 0, %s23
    %s43 = sphi 0, %s43
    %s45 = sphi 0, %s43
    %s46 = sphi 0, %s45
    %s60 = sphi 0, %s46
    %s64 = sphi 0, %s64
    %s66 = sphi 0, %s64
    %s67 = sphi 0, %s66
    %s81 = sphi 0, %s67
    %s87 = sphi 0, %s89
    %s90 = sphi 0, %s87
    %s91 = sphi 0, %s90
    %s107 = sphi 0, %s91
  $region4: #{lenet_forward.4} parent=0 // loop_header_branch
    %12 = sbr.rel (%p10) target = $region8
  $region5: #{lenet_forward.4} parent=0 // loop_body
    %s14 = ssub.s32 %s9, 1
    %s15 = ssub.s32 %s9, 2
    %s16 = sadd.s32 %s9, 1
    %s17 = ssub.s32 %s9, %s16
    %p18 = scmp.eq.s32.totalorder %s17, 0
    %s20 = sadd.s32 %s19, 1
    %s21 = scalar_select %p18, %s19, %s20
    %p24 = pneg %p18
    %p25 = scmp.eq.s32.totalorder %s9, 1
    %p26 = por %p24, %p25
    %p27 = scmp.ne.s32.totalorder %s19, %s22
    %p28 = scmp.eq.s32.totalorder %s9, 0
    %p29 = por %p27, %p28
    %p30 = scmp.ne.s32.totalorder %s19, %s22
    %p31 = scmp.eq.s32.totalorder %s14, 1
    %p32 = por %p30, %p31
    %p33 = scmp.ne.s32.totalorder %s22, %s23
    %p34 = scmp.eq.s32.totalorder %s14, 0
    %p35 = por %p33, %p34
    %p36 = scmp.ne.s32.totalorder %s22, %s23
    %p37 = scmp.eq.s32.totalorder %s15, 1
    %p38 = por %p36, %p37
    %p40 = scmp.ne.s32.totalorder %s23, %s39
    %p41 = scmp.eq.s32.totalorder %s15, 0
    %p42 = por %p40, %p41
    %s44 = sadd.s32 %s43, 1
    %p47 = scmp.eq.s32.totalorder %s9, 1
    %p48 = scmp.ne.s32.totalorder %s43, %s45
    %p49 = scmp.eq.s32.totalorder %s9, 0
    %p50 = por %p48, %p49
    %p51 = scmp.ne.s32.totalorder %s43, %s45
    %p52 = scmp.eq.s32.totalorder %s14, 1
    %p53 = por %p51, %p52
    %p54 = scmp.ne.s32.totalorder %s45, %s46
    %p55 = scmp.eq.s32.totalorder %s14, 0
    %p56 = por %p54, %p55
    %p57 = scmp.ne.s32.totalorder %s45, %s46
    %p58 = scmp.eq.s32.totalorder %s15, 1
    %p59 = por %p57, %p58
    %p61 = scmp.ne.s32.totalorder %s46, %s60
    %p62 = scmp.eq.s32.totalorder %s15, 0
    %p63 = por %p61, %p62
    %s65 = sadd.s32 %s64, 1
    %p68 = scmp.eq.s32.totalorder %s9, 1
    %p69 = scmp.ne.s32.totalorder %s64, %s66
    %p70 = scmp.eq.s32.totalorder %s9, 0
    %p71 = por %p69, %p70
    %p72 = scmp.ne.s32.totalorder %s64, %s66
    %p73 = scmp.eq.s32.totalorder %s14, 1
    %p74 = por %p72, %p73
    %p75 = scmp.ne.s32.totalorder %s66, %s67
    %p76 = scmp.eq.s32.totalorder %s14, 0
    %p77 = por %p75, %p76
    %p78 = scmp.ne.s32.totalorder %s66, %s67
    %p79 = scmp.eq.s32.totalorder %s15, 1
    %p80 = por %p78, %p79
    %p82 = scmp.ne.s32.totalorder %s67, %s81
    %p83 = scmp.eq.s32.totalorder %s15, 0
    %p84 = por %p82, %p83
    %s85 = ssub.s32 %s9, %s16
    %p86 = scmp.eq.s32.totalorder %s85, 0
    %s88 = sadd.s32 %s87, 1
    %s89 = scalar_select %p86, %s87, %s88
    %p92 = pneg %p86
    %p93 = scmp.eq.s32.totalorder %s9, 1
    %p94 = por %p92, %p93
    %p95 = scmp.ne.s32.totalorder %s87, %s90
    %p96 = scmp.eq.s32.totalorder %s9, 0
    %p97 = por %p95, %p96
    %p98 = scmp.ne.s32.totalorder %s87, %s90
    %p99 = scmp.eq.s32.totalorder %s14, 1
    %p100 = por %p98, %p99
    %p101 = scmp.ne.s32.totalorder %s90, %s91
    %p102 = scmp.eq.s32.totalorder %s14, 0
    %p103 = por %p101, %p102
    %p104 = scmp.ne.s32.totalorder %s90, %s91
    %p105 = scmp.eq.s32.totalorder %s15, 1
    %p106 = por %p104, %p105
    %p108 = scmp.ne.s32.totalorder %s91, %s107
    %p109 = scmp.eq.s32.totalorder %s15, 0
    %p110 = por %p108, %p109
    %p111 = scmp.le.s32.totalorder 1, %s9
    %p112 = scmp.lt.s32.totalorder %s9, 3
    %p113 = pnand %p111, %p112
    %p114 = pneg %p113
    // Predicated region
    $region9: #{lenet_forward.4} parent=5 // pred_check
      _
    $region10: #{lenet_forward.4} parent=5 // pred_check_branch
      %116 = sbr.rel (%p113) target = $region12
    $region11: #{lenet_forward.4} parent=5 // pred_region
      %s117 = ssub.s32 %s9, 1
      // Predicated region
      $region13: #{lenet_forward.4} parent=11 // pred_check
        %p118 = pneg %p56
      $region14: #{lenet_forward.4} parent=11 // pred_check_branch
        %120 = sbr.rel (%p118) target = $region16
      $region15: #{lenet_forward.4} parent=11 // pred_region
        _
      $region16: #{lenet_forward.4} parent=11 // pred_fallthru
        _
      // Predicated region
      $region17: #{lenet_forward.4} parent=11 // pred_check
        %p121 = pneg %p77
      $region18: #{lenet_forward.4} parent=11 // pred_check_branch
        %123 = sbr.rel (%p121) target = $region20
      $region19: #{lenet_forward.4} parent=11 // pred_region
        _
      $region20: #{lenet_forward.4} parent=11 // pred_fallthru
        _
    $region12: #{lenet_forward.4} parent=5 // pred_fallthru
      _
    %p124 = scmp.lt.s32.totalorder %s9, 2
    // Predicated region
    $region21: #{lenet_forward.4} parent=5 // pred_check
      %p125 = pneg %p124
    $region22: #{lenet_forward.4} parent=5 // pred_check_branch
      %127 = sbr.rel (%p125) target = $region24
    $region23: #{lenet_forward.4} parent=5 // pred_region
      // Predicated region
      $region25: #{lenet_forward.4} parent=23 // pred_check
        %p128 = pneg %p29
      $region26: #{lenet_forward.4} parent=23 // pred_check_branch
        %130 = sbr.rel (%p128) target = $region28
      $region27: #{lenet_forward.4} parent=23 // pred_region
        %p131 = scmp.lt.s32.totalorder %s9, 1
        %s132 = scalar_select %p131, %s9, 1
        %s133 = smul.addr %s132, 32
        %s134 = smul.addr %s133, 4
        %s135 = scalar_lea.vmem %s0, %s134
      $region28: #{lenet_forward.4} parent=23 // pred_fallthru
        _
    $region24: #{lenet_forward.4} parent=5 // pred_fallthru
      _
    %p136 = scmp.le.s32.totalorder 1, %s9
    %p137 = scmp.lt.s32.totalorder %s9, 3
    %p138 = pnand %p136, %p137
    %p139 = pneg %p138
    // Predicated region
    $region29: #{lenet_forward.4} parent=5 // pred_check
      _
    $region30: #{lenet_forward.4} parent=5 // pred_check_branch
      %141 = sbr.rel (%p138) target = $region32
    $region31: #{lenet_forward.4} parent=5 // pred_region
      %s142 = ssub.s32 %s9, 1
      %p143 = scmp.lt.s32.totalorder %s14, 1
      %s144 = scalar_select %p143, %s14, 1
      %s145 = smul.addr %s144, 32
      %s146 = smul.addr %s145, 4
      %s147 = scalar_lea.vmem %s0, %s146
      %p148 = pneg %p35
      %p149 = pneg %p32
      %p150 = pneg %p56
      %p151 = pneg %p53
      %p152 = pneg %p77
      %p153 = pneg %p74
      %p154 = pneg %p103
      %p155 = pneg %p100
      %p156 = scmp.lt.s32.totalorder %s14, 1
      %s157 = scalar_select %p156, %s14, 1
      %s158 = smul.addr %s157, 4
      %s159 = smul.addr %s158, 8
      %s160 = scalar_lea.vmem %s3, %s159
      %p161 = scmp.lt.s32.totalorder %s14, 1
      %s162 = scalar_select %p161, %s14, 1
      %s163 = smul.addr %s162, 32
      %s164 = smul.addr %s163, 4
      %s165 = scalar_lea.vmem %s0, %s164
      %p166 = scmp.lt.s32.totalorder %s14, 1
      %s167 = scalar_select %p166, %s14, 1
      %s168 = smul.addr %s167, 4
      %s169 = smul.addr %s168, 8
      %s170 = scalar_lea.vmem %s3, %s169
      %v172 = vld [vmem:[%s1] sm:$0xf]
      %v173 = vld [vmem:[%s1 + $0x4] sm:$0xf]
      %v174 = vld [vmem:[%s1 + $0x8] sm:$0xf]
      %v175 = vld [vmem:[%s1 + $0xc] sm:$0xf]
      %v176 = vld [vmem:[%s1 + $0x10] sm:$0xf]
      %v177 = vld [vmem:[%s1 + $0x14] sm:$0xf]
      %v178 = vld [vmem:[%s1 + $0x18] sm:$0xf]
      %v179 = vld [vmem:[%s1 + $0x1c] sm:$0xf]
      %v180 = vld [vmem:[%s1 + $0x20] sm:$0xf]
      %v181 = vld [vmem:[%s1 + $0x24] sm:$0xf]
      %v182 = vld [vmem:[%s1 + $0x28] sm:$0xf]
      %v183 = vld [vmem:[%s1 + $0x2c] sm:$0xf]
      %v184 = vld [vmem:[%s1 + $0x30] sm:$0xf]
      %v185 = vld [vmem:[%s1 + $0x34] sm:$0xf]
      %v186 = vld [vmem:[%s1 + $0x38] sm:$0xf]
      %v187 = vld [vmem:[%s1 + $0x3c] sm:$0xf]
      %v188 = vld [vmem:[%s1 + $0x40] sm:$0xf]
      %v189 = vld [vmem:[%s1 + $0x44] sm:$0xf]
      %v190 = vld [vmem:[%s1 + $0x48] sm:$0xf]
      %v191 = vld [vmem:[%s1 + $0x4c] sm:$0xf]
      %v192 = vld [vmem:[%s1 + $0x50] sm:$0xf]
      %v193 = vld [vmem:[%s1 + $0x54] sm:$0xf]
      %v194 = vld [vmem:[%s1 + $0x58] sm:$0xf]
      %v195 = vld [vmem:[%s1 + $0x5c] sm:$0xf]
      %v196 = vld [vmem:[%s1 + $0x60] sm:$0xf]
      %v197 = vld [vmem:[%s1 + $0x64] sm:$0xf]
      %v198 = vld [vmem:[%s1 + $0x68] sm:$0xf]
      %v199 = vld [vmem:[%s1 + $0x6c] sm:$0xf]
      %v200 = vld [vmem:[%s1 + $0x70] sm:$0xf]
      %v201 = vld [vmem:[%s1 + $0x74] sm:$0xf]
      %v202 = vld [vmem:[%s1 + $0x78] sm:$0xf]
      %v203 = vld [vmem:[%s1 + $0x7c] sm:$0xf]
      %v204 = vld [vmem:[%s165] sm:$0xff]
      %v205 = vld [vmem:[%s165 + $0x8] sm:$0xff]
      %v206 = vld [vmem:[%s165 + $0x10] sm:$0xff]
      %v207 = vld [vmem:[%s165 + $0x18] sm:$0x11]
      %v212 = vunpack.c.l.b16 %v204
      %v213 = vunpack.c.h.b16 %v204
      %v214 = vunpack.c.l.b16 %v205
      %v215 = vunpack.c.h.b16 %v205
      %v216 = vunpack.c.l.b16 %v206
      %v217 = vunpack.c.h.b16 %v206
      %v218 = vunpack.c.l.b16 %v207
      %v219 = vunpack.c.h.b16 %v207
      %v220 = vpack.c.b16 %v214, %v212
      %v221 = vpack.c.b16 %v215, %v213
      %v222 = vpack.c.b16 %v218, %v216
      %v223 = vpack.c.b16 %v219, %v217
      %v260 = vunpack.c.l.b16 %v172
      %v261 = vunpack.c.l.b16 %v173
      %v262 = vunpack.c.l.b16 %v174
      %v263 = vunpack.c.l.b16 %v175
      %v264 = vunpack.c.l.b16 %v176
      %v265 = vunpack.c.l.b16 %v177
      %v266 = vunpack.c.l.b16 %v178
      %v267 = vunpack.c.l.b16 %v179
      %v268 = vunpack.c.l.b16 %v180
      %v269 = vunpack.c.l.b16 %v181
      %v270 = vunpack.c.l.b16 %v182
      %v271 = vunpack.c.l.b16 %v183
      %v272 = vunpack.c.l.b16 %v184
      %v273 = vunpack.c.l.b16 %v185
      %v274 = vunpack.c.l.b16 %v186
      %v275 = vunpack.c.l.b16 %v187
      %v276 = vunpack.c.l.b16 %v188
      %v277 = vunpack.c.l.b16 %v189
      %v278 = vunpack.c.l.b16 %v190
      %v279 = vunpack.c.l.b16 %v191
      %v280 = vunpack.c.l.b16 %v192
      %v281 = vunpack.c.l.b16 %v193
      %v282 = vunpack.c.l.b16 %v194
      %v283 = vunpack.c.l.b16 %v195
      %v284 = vunpack.c.l.b16 %v196
      %v285 = vunpack.c.l.b16 %v197
      %v286 = vunpack.c.l.b16 %v198
      %v287 = vunpack.c.l.b16 %v199
      %v288 = vunpack.c.l.b16 %v200
      %v289 = vunpack.c.l.b16 %v201
      %v290 = vunpack.c.l.b16 %v202
      %v291 = vunpack.c.l.b16 %v203
      %v292 = vpack.c.b16 %v261, %v260
      %v293 = vpack.c.b16 %v263, %v262
      %v294 = vpack.c.b16 %v265, %v264
      %v295 = vpack.c.b16 %v267, %v266
      %v296 = vpack.c.b16 %v269, %v268
      %v297 = vpack.c.b16 %v271, %v270
      %v298 = vpack.c.b16 %v273, %v272
      %v299 = vpack.c.b16 %v275, %v274
      %v300 = vpack.c.b16 %v277, %v276
      %v301 = vpack.c.b16 %v279, %v278
      %v302 = vpack.c.b16 %v281, %v280
      %v303 = vpack.c.b16 %v283, %v282
      %v304 = vpack.c.b16 %v285, %v284
      %v305 = vpack.c.b16 %v287, %v286
      %v306 = vpack.c.b16 %v289, %v288
      %v307 = vpack.c.b16 %v291, %v290
      %324 = vmatprep.subr.bf16.mxu0 0
      %325 = vmatpush1.bf16.msra.mxu0 %v292
      %326 = vmatprep.subr.bf16.mxu0 0
      %327 = vmatpush1.bf16.msra.mxu0 %v293
      %328 = vmatprep.subr.bf16.mxu0 0
      %329 = vmatpush1.bf16.msra.mxu0 %v294
      %330 = vmatprep.subr.bf16.mxu0 0
      %331 = vmatpush1.bf16.msra.mxu0 %v295
      %332 = vmatprep.subr.bf16.mxu0 0
      %333 = vmatpush1.bf16.msra.mxu0 %v296
      %334 = vmatprep.subr.bf16.mxu0 0
      %335 = vmatpush1.bf16.msra.mxu0 %v297
      %336 = vmatprep.subr.bf16.mxu0 0
      %337 = vmatpush1.bf16.msra.mxu0 %v298
      %338 = vmatprep.subr.bf16.mxu0 0
      %339 = vmatpush1.bf16.msra.mxu0 %v299
      %340 = vmatprep.subr.bf16.mxu0 0
      %341 = vmatpush1.bf16.msra.mxu0 %v300
      %342 = vmatprep.subr.bf16.mxu0 0
      %343 = vmatpush1.bf16.msra.mxu0 %v301
      %344 = vmatprep.subr.bf16.mxu0 0
      %345 = vmatpush1.bf16.msra.mxu0 %v302
      %346 = vmatprep.subr.bf16.mxu0 0
      %347 = vmatpush1.bf16.msra.mxu0 %v303
      %348 = vmatprep.subr.bf16.mxu0 0
      %349 = vmatpush1.bf16.msra.mxu0 %v304
      %350 = vmatprep.subr.bf16.mxu0 0
      %351 = vmatpush1.bf16.msra.mxu0 %v305
      %352 = vmatprep.subr.bf16.mxu0 0
      %353 = vmatpush1.bf16.msra.mxu0 %v306
      %354 = vmatprep.subr.bf16.mxu0 0
      %355 = vmatpush1.bf16.msra.mxu0 %v307
      %356 = vmatprep.mubr.bf16.mxu0 %v221
      %357 = vmatmul.mubr.bf16.gmra.mrb[0].mxu0 %v220
      %v358 = vpop.f32.mrb[0].mxu0
      %v359 = vadd.f32 0.0, %v358
      %v360 = vpop.f32.mrb[0].mxu0
      %v361 = vpop.f32.mrb[0].mxu0
      %v362 = vadd.f32 0.0, %v361
      %v363 = vpop.f32.mrb[0].mxu0
      %364 = vmatprep.mubr.bf16.mxu0 %v223
      %365 = vmatmul.mubr.bf16.gmra.mrb[0].mxu0 %v222
      %v366 = vpop.f32.mrb[0].mxu0
      %v367 = vadd.f32 0.0, %v366
      %v368 = vpop.f32.mrb[0].mxu0
      %v369 = vpop.f32.mrb[0].mxu0
      %v370 = vadd.f32 0.0, %v369
      %v371 = vpop.f32.mrb[0].mxu0
      %372 = vdwg.mxu0
      %s373 = scalar_lea.vmem %s165, 32
      %v374 = vld [vmem:[%s373] sm:$0xff]
      %v375 = vld [vmem:[%s373 + $0x8] sm:$0xff]
      %v376 = vld [vmem:[%s373 + $0x10] sm:$0xff]
      %v377 = vld [vmem:[%s373 + $0x18] sm:$0x11]
      %v382 = vunpack.c.l.b16 %v374
      %v383 = vunpack.c.h.b16 %v374
      %v384 = vunpack.c.l.b16 %v375
      %v385 = vunpack.c.h.b16 %v375
      %v386 = vunpack.c.l.b16 %v376
      %v387 = vunpack.c.h.b16 %v376
      %v388 = vunpack.c.l.b16 %v377
      %v389 = vunpack.c.h.b16 %v377
      %v390 = vpack.c.b16 %v384, %v382
      %v391 = vpack.c.b16 %v385, %v383
      %v392 = vpack.c.b16 %v388, %v386
      %v393 = vpack.c.b16 %v389, %v387
      %398 = vmatprep.subr.bf16.mxu0 0
      %399 = vmatpush1.bf16.msra.mxu0 %v292
      %400 = vmatprep.subr.bf16.mxu0 0
      %401 = vmatpush1.bf16.msra.mxu0 %v293
      %402 = vmatprep.subr.bf16.mxu0 0
      %403 = vmatpush1.bf16.msra.mxu0 %v294
      %404 = vmatprep.subr.bf16.mxu0 0
      %405 = vmatpush1.bf16.msra.mxu0 %v295
      %406 = vmatprep.subr.bf16.mxu0 0
      %407 = vmatpush1.bf16.msra.mxu0 %v296
      %408 = vmatprep.subr.bf16.mxu0 0
      %409 = vmatpush1.bf16.msra.mxu0 %v297
      %410 = vmatprep.subr.bf16.mxu0 0
      %411 = vmatpush1.bf16.msra.mxu0 %v298
      %412 = vmatprep.subr.bf16.mxu0 0
      %413 = vmatpush1.bf16.msra.mxu0 %v299
      %414 = vmatprep.subr.bf16.mxu0 0
      %415 = vmatpush1.bf16.msra.mxu0 %v300
      %416 = vmatprep.subr.bf16.mxu0 0
      %417 = vmatpush1.bf16.msra.mxu0 %v301
      %418 = vmatprep.subr.bf16.mxu0 0
      %419 = vmatpush1.bf16.msra.mxu0 %v302
      %420 = vmatprep.subr.bf16.mxu0 0
      %421 = vmatpush1.bf16.msra.mxu0 %v303
      %422 = vmatprep.subr.bf16.mxu0 0
      %423 = vmatpush1.bf16.msra.mxu0 %v304
      %424 = vmatprep.subr.bf16.mxu0 0
      %425 = vmatpush1.bf16.msra.mxu0 %v305
      %426 = vmatprep.subr.bf16.mxu0 0
      %427 = vmatpush1.bf16.msra.mxu0 %v306
      %428 = vmatprep.subr.bf16.mxu0 0
      %429 = vmatpush1.bf16.msra.mxu0 %v307
      %430 = vmatprep.mubr.bf16.mxu0 %v391
      %431 = vmatmul.mubr.bf16.gmra.mrb[0].mxu0 %v390
      %v432 = vpop.f32.mrb[0].mxu0
      %v433 = vadd.f32 0.0, %v432
      %v434 = vpop.f32.mrb[0].mxu0
      %v435 = vpop.f32.mrb[0].mxu0
      %v436 = vadd.f32 0.0, %v435
      %v437 = vpop.f32.mrb[0].mxu0
      %438 = vmatprep.mubr.bf16.mxu0 %v393
      %439 = vmatmul.mubr.bf16.gmra.mrb[0].mxu0 %v392
      %v440 = vpop.f32.mrb[0].mxu0
      %v441 = vadd.f32 0.0, %v440
      %v442 = vpop.f32.mrb[0].mxu0
      %v443 = vpop.f32.mrb[0].mxu0
      %v444 = vadd.f32 0.0, %v443
      %v445 = vpop.f32.mrb[0].mxu0
      %446 = vdwg.mxu0
      %v447 = vmax.f32 %v359, %v433
      %v448 = vmax.f32 %v362, %v436
      %v449 = vmax.f32 %v367, %v441
      %v450 = vmax.f32 %v370, %v444
      %s451 = scalar_lea.vmem %s165, 64
      %v452 = vld [vmem:[%s451] sm:$0xff]
      %v453 = vld [vmem:[%s451 + $0x8] sm:$0xff]
      %v454 = vld [vmem:[%s451 + $0x10] sm:$0xff]
      %v455 = vld [vmem:[%s451 + $0x18] sm:$0x11]
      %v460 = vunpack.c.l.b16 %v452
      %v461 = vunpack.c.h.b16 %v452
      %v462 = vunpack.c.l.b16 %v453
      %v463 = vunpack.c.h.b16 %v453
      %v464 = vunpack.c.l.b16 %v454
      %v465 = vunpack.c.h.b16 %v454
      %v466 = vunpack.c.l.b16 %v455
      %v467 = vunpack.c.h.b16 %v455
      %v468 = vpack.c.b16 %v462, %v460
      %v469 = vpack.c.b16 %v463, %v461
      %v470 = vpack.c.b16 %v466, %v464
      %v471 = vpack.c.b16 %v467, %v465
      %476 = vmatprep.subr.bf16.mxu0 0
      %477 = vmatpush1.bf16.msra.mxu0 %v292
      %478 = vmatprep.subr.bf16.mxu0 0
      %479 = vmatpush1.bf16.msra.mxu0 %v293
      %480 = vmatprep.subr.bf16.mxu0 0
      %481 = vmatpush1.bf16.msra.mxu0 %v294
      %482 = vmatprep.subr.bf16.mxu0 0
      %483 = vmatpush1.bf16.msra.mxu0 %v295
      %484 = vmatprep.subr.bf16.mxu0 0
      %485 = vmatpush1.bf16.msra.mxu0 %v296
      %486 = vmatprep.subr.bf16.mxu0 0
      %487 = vmatpush1.bf16.msra.mxu0 %v297
      %488 = vmatprep.subr.bf16.mxu0 0
      %489 = vmatpush1.bf16.msra.mxu0 %v298
      %490 = vmatprep.subr.bf16.mxu0 0
      %491 = vmatpush1.bf16.msra.mxu0 %v299
      %492 = vmatprep.subr.bf16.mxu0 0
      %493 = vmatpush1.bf16.msra.mxu0 %v300
      %494 = vmatprep.subr.bf16.mxu0 0
      %495 = vmatpush1.bf16.msra.mxu0 %v301
      %496 = vmatprep.subr.bf16.mxu0 0
      %497 = vmatpush1.bf16.msra.mxu0 %v302
      %498 = vmatprep.subr.bf16.mxu0 0
      %499 = vmatpush1.bf16.msra.mxu0 %v303
      %500 = vmatprep.subr.bf16.mxu0 0
      %501 = vmatpush1.bf16.msra.mxu0 %v304
      %502 = vmatprep.subr.bf16.mxu0 0
      %503 = vmatpush1.bf16.msra.mxu0 %v305
      %504 = vmatprep.subr.bf16.mxu0 0
      %505 = vmatpush1.bf16.msra.mxu0 %v306
      %506 = vmatprep.subr.bf16.mxu0 0
      %507 = vmatpush1.bf16.msra.mxu0 %v307
      %508 = vmatprep.mubr.bf16.mxu0 %v469
      %509 = vmatmul.mubr.bf16.gmra.mrb[0].mxu0 %v468
      %v510 = vpop.f32.mrb[0].mxu0
      %v511 = vadd.f32 0.0, %v510
      %v512 = vpop.f32.mrb[0].mxu0
      %v513 = vpop.f32.mrb[0].mxu0
      %v514 = vadd.f32 0.0, %v513
      %v515 = vpop.f32.mrb[0].mxu0
      %516 = vmatprep.mubr.bf16.mxu0 %v471
      %517 = vmatmul.mubr.bf16.gmra.mrb[0].mxu0 %v470
      %v518 = vpop.f32.mrb[0].mxu0
      %v519 = vadd.f32 0.0, %v518
      %v520 = vpop.f32.mrb[0].mxu0
      %v521 = vpop.f32.mrb[0].mxu0
      %v522 = vadd.f32 0.0, %v521
      %v523 = vpop.f32.mrb[0].mxu0
      %524 = vdwg.mxu0
      %s525 = scalar_lea.vmem %s165, 96
      %v526 = vld [vmem:[%s525] sm:$0xff]
      %v527 = vld [vmem:[%s525 + $0x8] sm:$0xff]
      %v528 = vld [vmem:[%s525 + $0x10] sm:$0xff]
      %v529 = vld [vmem:[%s525 + $0x18] sm:$0x11]
      %v534 = vunpack.c.l.b16 %v526
      %v535 = vunpack.c.h.b16 %v526
      %v536 = vunpack.c.l.b16 %v527
      %v537 = vunpack.c.h.b16 %v527
      %v538 = vunpack.c.l.b16 %v528
      %v539 = vunpack.c.h.b16 %v528
      %v540 = vunpack.c.l.b16 %v529
      %v541 = vunpack.c.h.b16 %v529
      %v542 = vpack.c.b16 %v536, %v534
      %v543 = vpack.c.b16 %v537, %v535
      %v544 = vpack.c.b16 %v540, %v538
      %v545 = vpack.c.b16 %v541, %v539
      %550 = vmatprep.subr.bf16.mxu0 0
      %551 = vmatpush1.bf16.msra.mxu0 %v292
      %552 = vmatprep.subr.bf16.mxu0 0
      %553 = vmatpush1.bf16.msra.mxu0 %v293
      %554 = vmatprep.subr.bf16.mxu0 0
      %555 = vmatpush1.bf16.msra.mxu0 %v294
      %556 = vmatprep.subr.bf16.mxu0 0
      %557 = vmatpush1.bf16.msra.mxu0 %v295
      %558 = vmatprep.subr.bf16.mxu0 0
      %559 = vmatpush1.bf16.msra.mxu0 %v296
      %560 = vmatprep.subr.bf16.mxu0 0
      %561 = vmatpush1.bf16.msra.mxu0 %v297
      %562 = vmatprep.subr.bf16.mxu0 0
      %563 = vmatpush1.bf16.msra.mxu0 %v298
      %564 = vmatprep.subr.bf16.mxu0 0
      %565 = vmatpush1.bf16.msra.mxu0 %v299
      %566 = vmatprep.subr.bf16.mxu0 0
      %567 = vmatpush1.bf16.msra.mxu0 %v300
      %568 = vmatprep.subr.bf16.mxu0 0
      %569 = vmatpush1.bf16.msra.mxu0 %v301
      %570 = vmatprep.subr.bf16.mxu0 0
      %571 = vmatpush1.bf16.msra.mxu0 %v302
      %572 = vmatprep.subr.bf16.mxu0 0
      %573 = vmatpush1.bf16.msra.mxu0 %v303
      %574 = vmatprep.subr.bf16.mxu0 0
      %575 = vmatpush1.bf16.msra.mxu0 %v304
      %576 = vmatprep.subr.bf16.mxu0 0
      %577 = vmatpush1.bf16.msra.mxu0 %v305
      %578 = vmatprep.subr.bf16.mxu0 0
      %579 = vmatpush1.bf16.msra.mxu0 %v306
      %580 = vmatprep.subr.bf16.mxu0 0
      %581 = vmatpush1.bf16.msra.mxu0 %v307
      %582 = vmatprep.mubr.bf16.mxu0 %v543
      %583 = vmatmul.mubr.bf16.gmra.mrb[0].mxu0 %v542
      %v584 = vpop.f32.mrb[0].mxu0
      %v585 = vadd.f32 0.0, %v584
      %v586 = vpop.f32.mrb[0].mxu0
      %v587 = vpop.f32.mrb[0].mxu0
      %v588 = vadd.f32 0.0, %v587
      %v589 = vpop.f32.mrb[0].mxu0
      %590 = vmatprep.mubr.bf16.mxu0 %v545
      %591 = vmatmul.mubr.bf16.gmra.mrb[0].mxu0 %v544
      %v592 = vpop.f32.mrb[0].mxu0
      %v593 = vadd.f32 0.0, %v592
      %v594 = vpop.f32.mrb[0].mxu0
      %v595 = vpop.f32.mrb[0].mxu0
      %v596 = vadd.f32 0.0, %v595
      %v597 = vpop.f32.mrb[0].mxu0
      %598 = vdwg.mxu0
      %v599 = vmax.f32 %v511, %v585
      %v600 = vmax.f32 %v514, %v588
      %v601 = vmax.f32 %v519, %v593
      %v602 = vmax.f32 %v522, %v596
      %v603 = vmax.f32 %v447, %v599
      %v604 = vmax.f32 %v448, %v600
      %v605 = vmax.f32 %v449, %v601
      %v606 = vmax.f32 %v450, %v602
      %v607 = vld [vmem:[%s2] sm:$0x1]
      %v609 = vlaneseq
      %v610 = vshrl.u32 %v609, 7
      %v611 = vsub.s32 0, %v610
      %v612 = vrot.slane %v607, %v611
      %v614 = vadd.f32 %v603, %v612
      %v615 = vadd.f32 %v604, %v612
      %v616 = vadd.f32 %v605, %v612
      %v617 = vadd.f32 %v606, %v612
      %v618 = vmax.f32 %v614, 0.0
      %v619 = vmax.f32 %v615, 0.0
      %v620 = vmax.f32 %v616, 0.0
      %v621 = vmax.f32 %v617, 0.0
      %622 = vst [vmem:[%s170] sm:$0xff] %v618
      %623 = vst [vmem:[%s170 + $0x8] sm:$0xff] %v619
      %624 = vst [vmem:[%s170 + $0x10] sm:$0xff] %v620
      %625 = vst [vmem:[%s170 + $0x18] sm:$0x1] %v621
      %p626 = scmp.lt.s32.totalorder %s14, 1
      %s627 = scalar_select %p626, %s14, 1
      %s628 = smul.addr %s627, 4
      %s629 = smul.addr %s628, 8
      %s630 = scalar_lea.vmem %s3, %s629
      // Predicated region
      $region33: #{lenet_forward.4} parent=31 // pred_check
        %p631 = pneg %p100
      $region34: #{lenet_forward.4} parent=31 // pred_check_branch
        %633 = sbr.rel (%p631) target = $region36
      $region35: #{lenet_forward.4} parent=31 // pred_region
        _
      $region36: #{lenet_forward.4} parent=31 // pred_fallthru
        _
    $region32: #{lenet_forward.4} parent=5 // pred_fallthru
      _
    %p634 = scmp.le.s32.totalorder 2, %s9
    // Predicated region
    $region37: #{lenet_forward.4} parent=5 // pred_check
      %p635 = pneg %p634
    $region38: #{lenet_forward.4} parent=5 // pred_check_branch
      %637 = sbr.rel (%p635) target = $region40
    $region39: #{lenet_forward.4} parent=5 // pred_region
      %s638 = ssub.s32 %s9, 2
      // Predicated region
      $region41: #{lenet_forward.4} parent=39 // pred_check
        %p639 = pneg %p106
      $region42: #{lenet_forward.4} parent=39 // pred_check_branch
        %641 = sbr.rel (%p639) target = $region44
      $region43: #{lenet_forward.4} parent=39 // pred_region
        %p642 = scmp.lt.s32.totalorder %s15, 1
        %s643 = scalar_select %p642, %s15, 1
        %s644 = smul.addr %s643, 4
        %s645 = smul.addr %s644, 8
        %s646 = scalar_lea.vmem %s3, %s645
      $region44: #{lenet_forward.4} parent=39 // pred_fallthru
        _
    $region40: #{lenet_forward.4} parent=5 // pred_fallthru
      _
  $region6: #{lenet_forward.4} parent=0 // loop_footer
    %s13 = sadd.s32 1, %s9
  $region7: #{lenet_forward.4} parent=0 // loop_footer_branch
    %8 = sbr.rel target = $region3
  $region8: #{lenet_forward.4} parent=0 // loop_exit
    _

// kernel: lenet_forward.5
$region0: #{lenet_forward.5}
  #allocation0 [shape = 'u32[]', space=smem, size = 0x4, offset = 0x4, fixed_abs, tag = 'smem constant byte address 0x4 - core index']
  #allocation1 [shape = 'u32[144,128]{1,0:T(1,128)}', space=vmem, size = 0x12000, scoped, tag = 'internal scratch']
  %s0 = inlined_call_operand.vmem [shape: bf16[2,512], index: 0, kind: input, shape index: {}]
  %s1 = inlined_call_operand.vmem [shape: bf16[512,128], index: 1, kind: input, shape index: {}]
  %s2 = inlined_call_operand.vmem [shape: f32[1,128], index: 2, kind: input, shape index: {}]
  %s3 = inlined_call_operand.vmem [shape: bf16[128,128], index: 3, kind: input, shape index: {}]
  %s4 = inlined_call_operand.vmem [shape: f32[1,128], index: 4, kind: input, shape index: {}]
  %s5 = inlined_call_operand.vmem [shape: bf16[128,128], index: 5, kind: input, shape index: {}]
  %s6 = inlined_call_operand.vmem [shape: f32[1,128], index: 6, kind: input, shape index: {}]
  %s7 = inlined_call_operand.hbm [shape: f32[2,128], index: 7, kind: output, shape index: {}]
  %s8 = sld [smem:[#allocation0]]
  $region38: #{lenet_forward.5} parent=0
    _
  %s10 = ssub.s32 1, %s8
  %s11 = scalar_select 0, %s10, %s8
  $region1: #{lenet_forward.5} parent=0
    #allocation2 [shape = 'u8[1024]{0}', space=vmem, size = 0x400, scoped, tag = 'output window, operand 0, single buffered']
    #allocation3 [shape = 's32[1]{0}', space=sflag, size = 0x4, scoped, tag = 'scoped memory for lenet_forward.5']
    %12 = vsyncpa [#allocation3], 0
    // Predicated region
    $region2: #{lenet_forward.5} parent=1 // pred_check
      _
    $region3: #{lenet_forward.5} parent=1 // pred_check_branch
      %14 = sbr.rel (0) target = $region5
    $region4: #{lenet_forward.5} parent=1 // pred_region
      _
    $region5: #{lenet_forward.5} parent=1 // pred_fallthru
      _
    // Predicated region
    $region6: #{lenet_forward.5} parent=1 // pred_check
      _
    $region7: #{lenet_forward.5} parent=1 // pred_check_branch
      %16 = sbr.rel (0) target = $region9
    $region8: #{lenet_forward.5} parent=1 // pred_region
      _
    $region9: #{lenet_forward.5} parent=1 // pred_fallthru
      _
    // Predicated region
    $region10: #{lenet_forward.5} parent=1 // pred_check
      _
    $region11: #{lenet_forward.5} parent=1 // pred_check_branch
      %18 = sbr.rel (0) target = $region13
    $region12: #{lenet_forward.5} parent=1 // pred_region
      _
    $region13: #{lenet_forward.5} parent=1 // pred_fallthru
      _
    // Predicated region
    $region14: #{lenet_forward.5} parent=1 // pred_check
      _
    $region15: #{lenet_forward.5} parent=1 // pred_check_branch
      %20 = sbr.rel (0) target = $region17
    $region16: #{lenet_forward.5} parent=1 // pred_region
      _
    $region17: #{lenet_forward.5} parent=1 // pred_fallthru
      _
    // Predicated region
    $region18: #{lenet_forward.5} parent=1 // pred_check
      _
    $region19: #{lenet_forward.5} parent=1 // pred_check_branch
      %22 = sbr.rel (0) target = $region21
    $region20: #{lenet_forward.5} parent=1 // pred_region
      _
    $region21: #{lenet_forward.5} parent=1 // pred_fallthru
      _
    // Predicated region
    $region22: #{lenet_forward.5} parent=1 // pred_check
      _
    $region23: #{lenet_forward.5} parent=1 // pred_check_branch
      %24 = sbr.rel (0) target = $region25
    $region24: #{lenet_forward.5} parent=1 // pred_region
      _
    $region25: #{lenet_forward.5} parent=1 // pred_fallthru
      _
    // Predicated region
    $region26: #{lenet_forward.5} parent=1 // pred_check
      _
    $region27: #{lenet_forward.5} parent=1 // pred_check_branch
      %26 = sbr.rel (0) target = $region29
    $region28: #{lenet_forward.5} parent=1 // pred_region
      _
    $region29: #{lenet_forward.5} parent=1 // pred_fallthru
      _
    %v28 = vld [vmem:[%s0] sm:$0xf]
    %v29 = vld [vmem:[%s1] sm:$0xf]
    %v30 = vld [vmem:[%s1 + $0x4] sm:$0xf]
    %v31 = vld [vmem:[%s1 + $0x8] sm:$0xf]
    %v32 = vld [vmem:[%s1 + $0xc] sm:$0xf]
    %v33 = vld [vmem:[%s1 + $0x10] sm:$0xf]
    %v34 = vld [vmem:[%s1 + $0x14] sm:$0xf]
    %v35 = vld [vmem:[%s1 + $0x18] sm:$0xf]
    %v36 = vld [vmem:[%s1 + $0x1c] sm:$0xf]
    %v37 = vld [vmem:[%s1 + $0x20] sm:$0xf]
    %v38 = vld [vmem:[%s1 + $0x24] sm:$0xf]
    %v39 = vld [vmem:[%s1 + $0x28] sm:$0xf]
    %v40 = vld [vmem:[%s1 + $0x2c] sm:$0xf]
    %v41 = vld [vmem:[%s1 + $0x30] sm:$0xf]
    %v42 = vld [vmem:[%s1 + $0x34] sm:$0xf]
    %v43 = vld [vmem:[%s1 + $0x38] sm:$0xf]
    %v44 = vld [vmem:[%s1 + $0x3c] sm:$0xf]
    %v45 = vld [vmem:[%s1 + $0x40] sm:$0xf]
    %v46 = vld [vmem:[%s1 + $0x44] sm:$0xf]
    %v47 = vld [vmem:[%s1 + $0x48] sm:$0xf]
    %v48 = vld [vmem:[%s1 + $0x4c] sm:$0xf]
    %v49 = vld [vmem:[%s1 + $0x50] sm:$0xf]
    %v50 = vld [vmem:[%s1 + $0x54] sm:$0xf]
    %v51 = vld [vmem:[%s1 + $0x58] sm:$0xf]
    %v52 = vld [vmem:[%s1 + $0x5c] sm:$0xf]
    %v53 = vld [vmem:[%s1 + $0x60] sm:$0xf]
    %v54 = vld [vmem:[%s1 + $0x64] sm:$0xf]
    %v55 = vld [vmem:[%s1 + $0x68] sm:$0xf]
    %v56 = vld [vmem:[%s1 + $0x6c] sm:$0xf]
    %v57 = vld [vmem:[%s1 + $0x70] sm:$0xf]
    %v58 = vld [vmem:[%s1 + $0x74] sm:$0xf]
    %v59 = vld [vmem:[%s1 + $0x78] sm:$0xf]
    %v60 = vld [vmem:[%s1 + $0x7c] sm:$0xf]
    %v61 = vld [vmem:[%s1 + $0x80] sm:$0xf]
    %v62 = vld [vmem:[%s1 + $0x84] sm:$0xf]
    %v63 = vld [vmem:[%s1 + $0x88] sm:$0xf]
    %v64 = vld [vmem:[%s1 + $0x8c] sm:$0xf]
    %v65 = vld [vmem:[%s1 + $0x90] sm:$0xf]
    %v66 = vld [vmem:[%s1 + $0x94] sm:$0xf]
    %v67 = vld [vmem:[%s1 + $0x98] sm:$0xf]
    %v68 = vld [vmem:[%s1 + $0x9c] sm:$0xf]
    %v69 = vld [vmem:[%s1 + $0xa0] sm:$0xf]
    %v70 = vld [vmem:[%s1 + $0xa4] sm:$0xf]
    %v71 = vld [vmem:[%s1 + $0xa8] sm:$0xf]
    %v72 = vld [vmem:[%s1 + $0xac] sm:$0xf]
    %v73 = vld [vmem:[%s1 + $0xb0] sm:$0xf]
    %v74 = vld [vmem:[%s1 + $0xb4] sm:$0xf]
    %v75 = vld [vmem:[%s1 + $0xb8] sm:$0xf]
    %v76 = vld [vmem:[%s1 + $0xbc] sm:$0xf]
    %v77 = vld [vmem:[%s1 + $0xc0] sm:$0xf]
    %v78 = vld [vmem:[%s1 + $0xc4] sm:$0xf]
    %v79 = vld [vmem:[%s1 + $0xc8] sm:$0xf]
    %v80 = vld [vmem:[%s1 + $0xcc] sm:$0xf]
    %v81 = vld [vmem:[%s1 + $0xd0] sm:$0xf]
    %v82 = vld [vmem:[%s1 + $0xd4] sm:$0xf]
    %v83 = vld [vmem:[%s1 + $0xd8] sm:$0xf]
    %v84 = vld [vmem:[%s1 + $0xdc] sm:$0xf]
    %v85 = vld [vmem:[%s1 + $0xe0] sm:$0xf]
    %v86 = vld [vmem:[%s1 + $0xe4] sm:$0xf]
    %v87 = vld [vmem:[%s1 + $0xe8] sm:$0xf]
    %v88 = vld [vmem:[%s1 + $0xec] sm:$0xf]
    %v89 = vld [vmem:[%s1 + $0xf0] sm:$0xf]
    %v90 = vld [vmem:[%s1 + $0xf4] sm:$0xf]
    %v91 = vld [vmem:[%s1 + $0xf8] sm:$0xf]
    %v92 = vld [vmem:[%s1 + $0xfc] sm:$0xf]
    %v93 = vld [vmem:[%s2] sm:$0x1]
    %v95 = vlaneseq
    %v96 = vshrl.u32 %v95, 7
    %v97 = vsub.s32 0, %v96
    %v98 = vrot.slane %v93, %v97
    %v102 = vunpack.c.l.s4 1966171168
    %v103 = vunpack.c.0.s8 %v102
    %v104 = vlaneseq
    %v105 = vshrl.u32 %v104, 7
    %v106 = vsub.s32 %v103, %v105
    %v107 = vrot.slane %v28, %v106
    %v108 = vcombine.high %v107, %v107
    %v110 = vunpack.c.l.s4 1966171168
    %v111 = vunpack.c.0.s8 %v110
    %v112 = vlaneseq
    %v113 = vshrl.u32 %v112, 7
    %v114 = vsub.s32 %v111, %v113
    %v115 = vrot.slane %v107, %v114
    %v117 = vunpack.c.l.s4 1966171168
    %v118 = vunpack.c.0.s8 %v117
    %v119 = vlaneseq
    %v120 = vshrl.u32 %v119, 7
    %v121 = vsub.s32 %v118, %v120
    %v122 = vrot.slane %v108, %v121
    %v123 = vcombine.high %v115, %v115
    %v124 = vcombine.high %v122, %v122
    %v193 = vunpack.c.l.b16 %v29
    %v194 = vunpack.c.l.b16 %v30
    %v195 = vunpack.c.l.b16 %v31
    %v196 = vunpack.c.l.b16 %v32
    %v197 = vunpack.c.l.b16 %v33
    %v198 = vunpack.c.l.b16 %v34
    %v199 = vunpack.c.l.b16 %v35
    %v200 = vunpack.c.l.b16 %v36
    %v201 = vunpack.c.l.b16 %v37
    %v202 = vunpack.c.l.b16 %v38
    %v203 = vunpack.c.l.b16 %v39
    %v204 = vunpack.c.l.b16 %v40
    %v205 = vunpack.c.l.b16 %v41
    %v206 = vunpack.c.l.b16 %v42
    %v207 = vunpack.c.l.b16 %v43
    %v208 = vunpack.c.l.b16 %v44
    %v209 = vunpack.c.l.b16 %v45
    %v210 = vunpack.c.l.b16 %v46
    %v211 = vunpack.c.l.b16 %v47
    %v212 = vunpack.c.l.b16 %v48
    %v213 = vunpack.c.l.b16 %v49
    %v214 = vunpack.c.l.b16 %v50
    %v215 = vunpack.c.l.b16 %v51
    %v216 = vunpack.c.l.b16 %v52
    %v217 = vunpack.c.l.b16 %v53
    %v218 = vunpack.c.l.b16 %v54
    %v219 = vunpack.c.l.b16 %v55
    %v220 = vunpack.c.l.b16 %v56
    %v221 = vunpack.c.l.b16 %v57
    %v222 = vunpack.c.l.b16 %v58
    %v223 = vunpack.c.l.b16 %v59
    %v224 = vunpack.c.l.b16 %v60
    %v225 = vunpack.c.l.b16 %v61
    %v226 = vunpack.c.l.b16 %v62
    %v227 = vunpack.c.l.b16 %v63
    %v228 = vunpack.c.l.b16 %v64
    %v229 = vunpack.c.l.b16 %v65
    %v230 = vunpack.c.l.b16 %v66
    %v231 = vunpack.c.l.b16 %v67
    %v232 = vunpack.c.l.b16 %v68
    %v233 = vunpack.c.l.b16 %v69
    %v234 = vunpack.c.l.b16 %v70
    %v235 = vunpack.c.l.b16 %v71
    %v236 = vunpack.c.l.b16 %v72
    %v237 = vunpack.c.l.b16 %v73
    %v238 = vunpack.c.l.b16 %v74
    %v239 = vunpack.c.l.b16 %v75
    %v240 = vunpack.c.l.b16 %v76
    %v241 = vunpack.c.l.b16 %v77
    %v242 = vunpack.c.l.b16 %v78
    %v243 = vunpack.c.l.b16 %v79
    %v244 = vunpack.c.l.b16 %v80
    %v245 = vunpack.c.l.b16 %v81
    %v246 = vunpack.c.l.b16 %v82
    %v247 = vunpack.c.l.b16 %v83
    %v248 = vunpack.c.l.b16 %v84
    %v249 = vunpack.c.l.b16 %v85
    %v250 = vunpack.c.l.b16 %v86
    %v251 = vunpack.c.l.b16 %v87
    %v252 = vunpack.c.l.b16 %v88
    %v253 = vunpack.c.l.b16 %v89
    %v254 = vunpack.c.l.b16 %v90
    %v255 = vunpack.c.l.b16 %v91
    %v256 = vunpack.c.l.b16 %v92
    %v257 = vpack.c.b16 %v194, %v193
    %v258 = vpack.c.b16 %v196, %v195
    %v259 = vpack.c.b16 %v198, %v197
    %v260 = vpack.c.b16 %v200, %v199
    %v261 = vpack.c.b16 %v202, %v201
    %v262 = vpack.c.b16 %v204, %v203
    %v263 = vpack.c.b16 %v206, %v205
    %v264 = vpack.c.b16 %v208, %v207
    %v265 = vpack.c.b16 %v210, %v209
    %v266 = vpack.c.b16 %v212, %v211
    %v267 = vpack.c.b16 %v214, %v213
    %v268 = vpack.c.b16 %v216, %v215
    %v269 = vpack.c.b16 %v218, %v217
    %v270 = vpack.c.b16 %v220, %v219
    %v271 = vpack.c.b16 %v222, %v221
    %v272 = vpack.c.b16 %v224, %v223
    %v273 = vpack.c.b16 %v226, %v225
    %v274 = vpack.c.b16 %v228, %v227
    %v275 = vpack.c.b16 %v230, %v229
    %v276 = vpack.c.b16 %v232, %v231
    %v277 = vpack.c.b16 %v234, %v233
    %v278 = vpack.c.b16 %v236, %v235
    %v279 = vpack.c.b16 %v238, %v237
    %v280 = vpack.c.b16 %v240, %v239
    %v281 = vpack.c.b16 %v242, %v241
    %v282 = vpack.c.b16 %v244, %v243
    %v283 = vpack.c.b16 %v246, %v245
    %v284 = vpack.c.b16 %v248, %v247
    %v285 = vpack.c.b16 %v250, %v249
    %v286 = vpack.c.b16 %v252, %v251
    %v287 = vpack.c.b16 %v254, %v253
    %v288 = vpack.c.b16 %v256, %v255
    %321 = vmatprep.subr.bf16.mxu0 0
    %322 = vmatpush1.bf16.msra.mxu0 %v257
    %323 = vmatprep.subr.bf16.mxu0 0
    %324 = vmatpush1.bf16.msra.mxu0 %v258
    %325 = vmatprep.subr.bf16.mxu0 0
    %326 = vmatpush1.bf16.msra.mxu0 %v259
    %327 = vmatprep.subr.bf16.mxu0 0
    %328 = vmatpush1.bf16.msra.mxu0 %v260
    %329 = vmatprep.subr.bf16.mxu0 0
    %330 = vmatpush1.bf16.msra.mxu0 %v261
    %331 = vmatprep.subr.bf16.mxu0 0
    %332 = vmatpush1.bf16.msra.mxu0 %v262
    %333 = vmatprep.subr.bf16.mxu0 0
    %334 = vmatpush1.bf16.msra.mxu0 %v263
    %335 = vmatprep.subr.bf16.mxu0 0
    %336 = vmatpush1.bf16.msra.mxu0 %v264
    %337 = vmatprep.subr.bf16.mxu0 0
    %338 = vmatpush1.bf16.msra.mxu0 %v265
    %339 = vmatprep.subr.bf16.mxu0 0
    %340 = vmatpush1.bf16.msra.mxu0 %v266
    %341 = vmatprep.subr.bf16.mxu0 0
    %342 = vmatpush1.bf16.msra.mxu0 %v267
    %343 = vmatprep.subr.bf16.mxu0 0
    %344 = vmatpush1.bf16.msra.mxu0 %v268
    %345 = vmatprep.subr.bf16.mxu0 0
    %346 = vmatpush1.bf16.msra.mxu0 %v269
    %347 = vmatprep.subr.bf16.mxu0 0
    %348 = vmatpush1.bf16.msra.mxu0 %v270
    %349 = vmatprep.subr.bf16.mxu0 0
    %350 = vmatpush1.bf16.msra.mxu0 %v271
    %351 = vmatprep.subr.bf16.mxu0 0
    %352 = vmatpush1.bf16.msra.mxu0 %v272
    %353 = vmatprep.mubr.bf16.mxu0 %v122
    %354 = vmatmul.mubr.bf16.gmra.mrb[0].mxu0 %v115
    %v355 = vpop.f32.mrb[0].mxu0
    %v356 = vadd.f32 %v98, %v355
    %v357 = vpop.f32.mrb[0].mxu0
    %v358 = vpop.f32.mrb[0].mxu0
    %v359 = vpop.f32.mrb[0].mxu0
    %360 = vdwg.mxu0
    %361 = vmatprep.subr.bf16.mxu0 0
    %362 = vmatpush1.bf16.msra.mxu0 %v273
    %363 = vmatprep.subr.bf16.mxu0 0
    %364 = vmatpush1.bf16.msra.mxu0 %v274
    %365 = vmatprep.subr.bf16.mxu0 0
    %366 = vmatpush1.bf16.msra.mxu0 %v275
    %367 = vmatprep.subr.bf16.mxu0 0
    %368 = vmatpush1.bf16.msra.mxu0 %v276
    %369 = vmatprep.subr.bf16.mxu0 0
    %370 = vmatpush1.bf16.msra.mxu0 %v277
    %371 = vmatprep.subr.bf16.mxu0 0
    %372 = vmatpush1.bf16.msra.mxu0 %v278
    %373 = vmatprep.subr.bf16.mxu0 0
    %374 = vmatpush1.bf16.msra.mxu0 %v279
    %375 = vmatprep.subr.bf16.mxu0 0
    %376 = vmatpush1.bf16.msra.mxu0 %v280
    %377 = vmatprep.subr.bf16.mxu0 0
    %378 = vmatpush1.bf16.msra.mxu0 %v281
    %379 = vmatprep.subr.bf16.mxu0 0
    %380 = vmatpush1.bf16.msra.mxu0 %v282
    %381 = vmatprep.subr.bf16.mxu0 0
    %382 = vmatpush1.bf16.msra.mxu0 %v283
    %383 = vmatprep.subr.bf16.mxu0 0
    %384 = vmatpush1.bf16.msra.mxu0 %v284
    %385 = vmatprep.subr.bf16.mxu0 0
    %386 = vmatpush1.bf16.msra.mxu0 %v285
    %387 = vmatprep.subr.bf16.mxu0 0
    %388 = vmatpush1.bf16.msra.mxu0 %v286
    %389 = vmatprep.subr.bf16.mxu0 0
    %390 = vmatpush1.bf16.msra.mxu0 %v287
    %391 = vmatprep.subr.bf16.mxu0 0
    %392 = vmatpush1.bf16.msra.mxu0 %v288
    %393 = vmatprep.mubr.bf16.mxu0 %v124
    %394 = vmatmul.mubr.bf16.gmra.mrb[0].mxu0 %v123
    %v395 = vpop.f32.mrb[0].mxu0
    %v396 = vadd.f32 %v356, %v395
    %v397 = vpop.f32.mrb[0].mxu0
    %v398 = vpop.f32.mrb[0].mxu0
    %v399 = vpop.f32.mrb[0].mxu0
    %400 = vdwg.mxu0
    %v401 = vmax.f32 %v396, 0.0
    %v402 = vpack.c.bf16 %v401, %v401
    %v403 = vld [vmem:[%s3] sm:$0xf]
    %v404 = vld [vmem:[%s3 + $0x4] sm:$0xf]
    %v405 = vld [vmem:[%s3 + $0x8] sm:$0xf]
    %v406 = vld [vmem:[%s3 + $0xc] sm:$0xf]
    %v407 = vld [vmem:[%s3 + $0x10] sm:$0xf]
    %v408 = vld [vmem:[%s3 + $0x14] sm:$0xf]
    %v409 = vld [vmem:[%s3 + $0x18] sm:$0xf]
    %v410 = vld [vmem:[%s3 + $0x1c] sm:$0xf]
    %v411 = vld [vmem:[%s3 + $0x20] sm:$0xf]
    %v412 = vld [vmem:[%s3 + $0x24] sm:$0xf]
    %v413 = vld [vmem:[%s3 + $0x28] sm:$0xf]
    %v414 = vld [vmem:[%s3 + $0x2c] sm:$0xf]
    %v415 = vld [vmem:[%s3 + $0x30] sm:$0xf]
    %v416 = vld [vmem:[%s3 + $0x34] sm:$0xf]
    %v417 = vld [vmem:[%s3 + $0x38] sm:$0xf]
    %v418 = vld [vmem:[%s3 + $0x3c] sm:$0xf]
    %v419 = vld [vmem:[%s4] sm:$0x1]
    %v421 = vlaneseq
    %v422 = vshrl.u32 %v421, 7
    %v423 = vsub.s32 0, %v422
    %v424 = vrot.slane %v419, %v423
    %v442 = vunpack.c.l.b16 %v403
    %v443 = vunpack.c.l.b16 %v404
    %v444 = vunpack.c.l.b16 %v405
    %v445 = vunpack.c.l.b16 %v406
    %v446 = vunpack.c.l.b16 %v407
    %v447 = vunpack.c.l.b16 %v408
    %v448 = vunpack.c.l.b16 %v409
    %v449 = vunpack.c.l.b16 %v410
    %v450 = vunpack.c.l.b16 %v411
    %v451 = vunpack.c.l.b16 %v412
    %v452 = vunpack.c.l.b16 %v413
    %v453 = vunpack.c.l.b16 %v414
    %v454 = vunpack.c.l.b16 %v415
    %v455 = vunpack.c.l.b16 %v416
    %v456 = vunpack.c.l.b16 %v417
    %v457 = vunpack.c.l.b16 %v418
    %v458 = vpack.c.b16 %v443, %v442
    %v459 = vpack.c.b16 %v445, %v444
    %v460 = vpack.c.b16 %v447, %v446
    %v461 = vpack.c.b16 %v449, %v448
    %v462 = vpack.c.b16 %v451, %v450
    %v463 = vpack.c.b16 %v453, %v452
    %v464 = vpack.c.b16 %v455, %v454
    %v465 = vpack.c.b16 %v457, %v456
    %474 = vmatprep.subr.bf16.mxu0 0
    %475 = vmatpush1.bf16.msra.mxu0 %v458
    %476 = vmatprep.subr.bf16.mxu0 0
    %477 = vmatpush1.bf16.msra.mxu0 %v459
    %478 = vmatprep.subr.bf16.mxu0 0
    %479 = vmatpush1.bf16.msra.mxu0 %v460
    %480 = vmatprep.subr.bf16.mxu0 0
    %481 = vmatpush1.bf16.msra.mxu0 %v461
    %482 = vmatprep.subr.bf16.mxu0 0
    %483 = vmatpush1.bf16.msra.mxu0 %v462
    %484 = vmatprep.subr.bf16.mxu0 0
    %485 = vmatpush1.bf16.msra.mxu0 %v463
    %486 = vmatprep.subr.bf16.mxu0 0
    %487 = vmatpush1.bf16.msra.mxu0 %v464
    %488 = vmatprep.subr.bf16.mxu0 0
    %489 = vmatpush1.bf16.msra.mxu0 %v465
    %490 = vmatprep.subr.bf16.mxu0 0
    %491 = vmatpush1.bf16.msra.mxu0 0
    %492 = vmatprep.subr.bf16.mxu0 0
    %493 = vmatpush1.bf16.msra.mxu0 0
    %494 = vmatprep.subr.bf16.mxu0 0
    %495 = vmatpush1.bf16.msra.mxu0 0
    %496 = vmatprep.subr.bf16.mxu0 0
    %497 = vmatpush1.bf16.msra.mxu0 0
    %498 = vmatprep.subr.bf16.mxu0 0
    %499 = vmatpush1.bf16.msra.mxu0 0
    %500 = vmatprep.subr.bf16.mxu0 0
    %501 = vmatpush1.bf16.msra.mxu0 0
    %502 = vmatprep.subr.bf16.mxu0 0
    %503 = vmatpush1.bf16.msra.mxu0 0
    %504 = vmatprep.subr.bf16.mxu0 0
    %505 = vmatpush1.bf16.msra.mxu0 0
    %506 = vmatprep.mubr.bf16.mxu0 0
    %507 = vmatmul.mubr.bf16.gmra.mrb[0].mxu0 %v402
    %v508 = vpop.f32.mrb[0].mxu0
    %v509 = vadd.f32 %v424, %v508
    %v510 = vpop.f32.mrb[0].mxu0
    %v511 = vpop.f32.mrb[0].mxu0
    %v512 = vpop.f32.mrb[0].mxu0
    %513 = vdwg.mxu0
    %v514 = vmax.f32 %v509, 0.0
    %v515 = vpack.c.bf16 %v514, %v514
    %v516 = vld [vmem:[%s5] sm:$0xf]
    %v517 = vld [vmem:[%s5 + $0x4] sm:$0xf]
    %v518 = vld [vmem:[%s5 + $0x8] sm:$0xf]
    %v519 = vld [vmem:[%s5 + $0xc] sm:$0xf]
    %v520 = vld [vmem:[%s5 + $0x10] sm:$0xf]
    %v521 = vld [vmem:[%s5 + $0x14] sm:$0xf]
    %v522 = vld [vmem:[%s5 + $0x18] sm:$0xf]
    %v523 = vld [vmem:[%s5 + $0x1c] sm:$0xf]
    %v524 = vld [vmem:[%s5 + $0x20] sm:$0xf]
    %v525 = vld [vmem:[%s5 + $0x24] sm:$0xf]
    %v526 = vld [vmem:[%s5 + $0x28] sm:$0xf]
    %v527 = vld [vmem:[%s5 + $0x2c] sm:$0xf]
    %v528 = vld [vmem:[%s5 + $0x30] sm:$0xf]
    %v529 = vld [vmem:[%s5 + $0x34] sm:$0xf]
    %v530 = vld [vmem:[%s5 + $0x38] sm:$0xf]
    %v531 = vld [vmem:[%s5 + $0x3c] sm:$0xf]
    %v532 = vld [vmem:[%s6] sm:$0x1]
    %v534 = vlaneseq
    %v535 = vshrl.u32 %v534, 7
    %v536 = vsub.s32 0, %v535
    %v537 = vrot.slane %v532, %v536
    %v555 = vunpack.c.l.b16 %v516
    %v556 = vunpack.c.l.b16 %v517
    %v557 = vunpack.c.l.b16 %v518
    %v558 = vunpack.c.l.b16 %v519
    %v559 = vunpack.c.l.b16 %v520
    %v560 = vunpack.c.l.b16 %v521
    %v561 = vunpack.c.l.b16 %v522
    %v562 = vunpack.c.l.b16 %v523
    %v563 = vunpack.c.l.b16 %v524
    %v564 = vunpack.c.l.b16 %v525
    %v565 = vunpack.c.l.b16 %v526
    %v566 = vunpack.c.l.b16 %v527
    %v567 = vunpack.c.l.b16 %v528
    %v568 = vunpack.c.l.b16 %v529
    %v569 = vunpack.c.l.b16 %v530
    %v570 = vunpack.c.l.b16 %v531
    %v571 = vpack.c.b16 %v556, %v555
    %v572 = vpack.c.b16 %v558, %v557
    %v573 = vpack.c.b16 %v560, %v559
    %v574 = vpack.c.b16 %v562, %v561
    %v575 = vpack.c.b16 %v564, %v563
    %v576 = vpack.c.b16 %v566, %v565
    %v577 = vpack.c.b16 %v568, %v567
    %v578 = vpack.c.b16 %v570, %v569
    %587 = vmatprep.subr.bf16.mxu0 0
    %588 = vmatpush1.bf16.msra.mxu0 %v571
    %589 = vmatprep.subr.bf16.mxu0 0
    %590 = vmatpush1.bf16.msra.mxu0 %v572
    %591 = vmatprep.subr.bf16.mxu0 0
    %592 = vmatpush1.bf16.msra.mxu0 %v573
    %593 = vmatprep.subr.bf16.mxu0 0
    %594 = vmatpush1.bf16.msra.mxu0 %v574
    %595 = vmatprep.subr.bf16.mxu0 0
    %596 = vmatpush1.bf16.msra.mxu0 %v575
    %597 = vmatprep.subr.bf16.mxu0 0
    %598 = vmatpush1.bf16.msra.mxu0 %v576
    %599 = vmatprep.subr.bf16.mxu0 0
    %600 = vmatpush1.bf16.msra.mxu0 %v577
    %601 = vmatprep.subr.bf16.mxu0 0
    %602 = vmatpush1.bf16.msra.mxu0 %v578
    %603 = vmatprep.subr.bf16.mxu0 0
    %604 = vmatpush1.bf16.msra.mxu0 0
    %605 = vmatprep.subr.bf16.mxu0 0
    %606 = vmatpush1.bf16.msra.mxu0 0
    %607 = vmatprep.subr.bf16.mxu0 0
    %608 = vmatpush1.bf16.msra.mxu0 0
    %609 = vmatprep.subr.bf16.mxu0 0
    %610 = vmatpush1.bf16.msra.mxu0 0
    %611 = vmatprep.subr.bf16.mxu0 0
    %612 = vmatpush1.bf16.msra.mxu0 0
    %613 = vmatprep.subr.bf16.mxu0 0
    %614 = vmatpush1.bf16.msra.mxu0 0
    %615 = vmatprep.subr.bf16.mxu0 0
    %616 = vmatpush1.bf16.msra.mxu0 0
    %617 = vmatprep.subr.bf16.mxu0 0
    %618 = vmatpush1.bf16.msra.mxu0 0
    %619 = vmatprep.mubr.bf16.mxu0 0
    %620 = vmatmul.mubr.bf16.gmra.mrb[0].mxu0 %v515
    %v621 = vpop.f32.mrb[0].mxu0
    %v622 = vadd.f32 %v537, %v621
    %v623 = vpop.f32.mrb[0].mxu0
    %v624 = vpop.f32.mrb[0].mxu0
    %v625 = vpop.f32.mrb[0].mxu0
    %626 = vdwg.mxu0
    %627 = vst [vmem:[#allocation2] sm:$0x3] %v622
    // Predicated region
    $region30: #{lenet_forward.5} parent=1 // pred_check
      _
    $region31: #{lenet_forward.5} parent=1 // pred_check_branch
      %629 = sbr.rel (0) target = $region33
    $region32: #{lenet_forward.5} parent=1 // pred_region
      %s631 = ssub.s32 32, 32
      %632 = vsyncadd [#allocation3], %s631
      %s634 = sshll.u32 [#allocation2], 4
      %s635 = int_to_ptr.vmem [resolvable:$true] %s634
      %637 = dma.vmem_to_hbm [thread:$0]  %s635, 32, %s7, [#allocation3]
    $region33: #{lenet_forward.5} parent=1 // pred_fallthru
      _
    // Predicated region
    $region34: #{lenet_forward.5} parent=1 // pred_check
      _
    $region35: #{lenet_forward.5} parent=1 // pred_check_branch
      %639 = sbr.rel (0) target = $region37
    $region36: #{lenet_forward.5} parent=1 // pred_region
      %640 = dma.done [#allocation3], 32
    $region37: #{lenet_forward.5} parent=1 // pred_fallthru
      _
    %641 = vsyncpa [#allocation3], 1

</llo_original>
